<compile_context>
chip_gen: v5e
topology: v5e:2x2
jax: 0.10.0
libtpu: 0.0.40
codegen_flags: <defaults>
</compile_context>

<pallas_src>
import jax
import jax.numpy as jnp
from jax.experimental import pallas as pl
from jax.experimental.pallas import tpu as pltpu


# ----------------------------- hyperparameters -----------------------------
class Hyperparameter:
    FEATURE_DIM = 8
    OUTPUT_DIM = 8
    HIDDEN_DIM = 16
    INPUT_SEQ_LEN = 6
    OUTPUT_SEQ_LEN = 5
    TEACHER_FORCING_RATIO = 0.5
    BATCH = 4


# ------------------------------ gate nonlinearity ----------------------------
def _lstm_gates(gates, c, H):
    """gates: [B, 4H] pre-activations (i, f, g, o order, biases already added).

    EUP-lean: one sigmoid and one tanh over the whole [B, 4H] value, gates are
    lane-sliced from those results (instead of 4 separate transcendental calls).
    """
    sg = jax.nn.sigmoid(gates)          # one EUP pass over [B, 4H]
    tg = jnp.tanh(gates)                # one EUP pass over [B, 4H]
    i_g = sg[:, 0 * H:1 * H]
    f_g = sg[:, 1 * H:2 * H]
    g_g = tg[:, 2 * H:3 * H]
    o_g = sg[:, 3 * H:4 * H]
    c_new = f_g * c + i_g * g_g
    h_new = o_g * jnp.tanh(c_new)
    return h_new, c_new


# -------------------------------- fused kernel --------------------------------
def seq2seq_kernel(
    tf_ref,                                   # SMEM int32 [T_out] teacher-forcing mask
    x_ref, y_ref,                             # VMEM [T_in, B, F], [T_out, B, O]
    enc_w_ih_ref, enc_w_hh_ref, enc_b_ref,    # [F, 4H], [H, 4H], [1, 4H]
    bridge_w_ref, bridge_b_ref,               # [F, 4H], [1, 4H]  (lin1∘lin2∘dec_W_x composed)
    dec_w_x_ref,                              # [O, 4H]           (decoder input weight)
    w_comb_ref,                               # [H, 8H] = [dec_w_hh | dec_w_out @ dec_w_x]
    dec_b_ref,                                # [1, 4H]           (decoder b_ih + b_hh)
    bc_x_ref,                                 # [1, 4H] = dec_b_out @ dec_w_x
    dec_w_out_ref, dec_b_out_ref,             # [H, O], [1, O]
    out_ref,                                  # VMEM [T_out, B, O]
):
    T_in, B, F = x_ref.shape
    T_out, _, O = out_ref.shape
    H = enc_w_hh_ref.shape[0]
    H4 = 4 * H

    # -------- off-critical-path projections (overlap with the encoder chain) --------
    # Encoder input projection for all timesteps in one matmul, bias folded in once.
    x_all = x_ref[...].reshape(T_in * B, F)
    gates_x = (
        jnp.dot(x_all, enc_w_ih_ref[...], preferred_element_type=jnp.float32)
        + enc_b_ref[...]
    )                                                    # [T_in*B, 4H]

    # Decoder step-0 input-gate contribution: bridge Linear,Linear and the decoder
    # input weight are fully composed into one [F, 4H] matmul.
    gx0 = (
        jnp.dot(x_ref[T_in - 1], bridge_w_ref[...], preferred_element_type=jnp.float32)
        + bridge_b_ref[...]
    )                                                    # [B, 4H]

    # Teacher-forced input-gate contributions, one batched matmul
    # (last y step is never used by the reference -> dropped).
    y_tf = y_ref[0:T_out - 1].reshape((T_out - 1) * B, O)
    gy = jnp.dot(y_tf, dec_w_x_ref[...], preferred_element_type=jnp.float32)  # [(T_out-1)*B, 4H]

    # -------- encoder serial chain (fully unrolled, T_in = 6) --------
    enc_w_hh = enc_w_hh_ref[...]
    h = jnp.zeros((B, H), jnp.float32)
    c = jnp.zeros((B, H), jnp.float32)
    for t in range(T_in):
        gates = gates_x[t * B:(t + 1) * B, :] + jnp.dot(
            h, enc_w_hh, preferred_element_type=jnp.float32
        )
        h, c = _lstm_gates(gates, c, H)

    # -------- autoregressive decoder: ONE lane-dense matmul per step --------
    w_comb = w_comb_ref[...]                                       # [H, 8H] (8H = 128 lanes)
    dec_b = jnp.broadcast_to(dec_b_ref[...], (B, H4))              # hoisted broadcast
    bc_x = jnp.broadcast_to(bc_x_ref[...], (B, H4))                # hoisted broadcast

    hs = []
    for s in range(T_out):                   # fully unrolled (T_out = 5)
        # z[:, :4H]  = h_prev @ dec_w_hh           (recurrent contribution for THIS step)
        # z[:, 4H:]  = h_prev @ dec_w_out @ dec_w_x (previous step's output, projected to
        #                                            this step's input-gate contribution)
        z = jnp.dot(h, w_comb, preferred_element_type=jnp.float32)            # [B, 8H]
        if s == 0:
            gx = gx0
        else:
            m = tf_ref[s - 1].astype(jnp.float32)    # teacher-forcing coin for step s-1
            gx = m * gy[(s - 1) * B:s * B, :] + (1.0 - m) * (z[:, H4:] + bc_x)
        gates = gx + z[:, :H4] + dec_b
        h, c = _lstm_gates(gates, c, H)
        hs.append(h)

    # -------- batched output projection + single store --------
    h_all = jnp.concatenate(hs, axis=0)                            # [T_out*B, H]
    out = (
        jnp.dot(h_all, dec_w_out_ref[...], preferred_element_type=jnp.float32)
        + dec_b_out_ref[...]
    )                                                              # [T_out*B, O]
    out_ref[...] = out.reshape(T_out, B, O)


# ------------------------------- wrapper --------------------------------------
def seq2seq_forward(params, x, y, tf_mask):
    """
    x:       [input_seq_len, batch, FEATURE_DIM]  float32
    y:       [output_seq_len, batch, OUTPUT_DIM]  float32
    tf_mask: [output_seq_len] int32 (1 = use ground truth y[i] as next input)
    returns: [output_seq_len, batch, OUTPUT_DIM]
    """
    T_in, B, F = x.shape
    T_out, _, O = y.shape

    # Pad batch up to a multiple of 8 sublanes; padded rows are sliced off below.
    B_pad = ((B + 7) // 8) * 8
    pad = B_pad - B
    x_p = jnp.pad(x, ((0, 0), (0, pad), (0, 0)))
    y_p = jnp.pad(y, ((0, 0), (0, pad), (0, 0)))

    # ---- algebraic weight composition (tiny, done once outside the kernel) ----
    dec_w_x = params["dec_w_ih"]                                   # [O, 4H]
    dec_w_hh = params["dec_w_hh"]                                  # [H, 4H]
    # Combined per-step decoder weight: [dec_w_hh | dec_w_out @ dec_w_x]  -> [H, 8H]
    w_comb = jnp.concatenate([dec_w_hh, params["dec_w_out"] @ dec_w_x], axis=1)
    bc_x = params["dec_b_out"] @ dec_w_x                           # [1, 4H]
    # Fused bridge: Linear(F,F) ∘ Linear(F,O) ∘ dec_w_x  -> [F, 4H]
    w12 = params["lin_w1"] @ params["lin_w2"]
    b12 = params["lin_b1"] @ params["lin_w2"] + params["lin_b2"]
    bridge_w = w12 @ dec_w_x
    bridge_b = b12 @ dec_w_x

    out = pl.pallas_call(
        seq2seq_kernel,
        out_shape=jax.ShapeDtypeStruct((T_out, B_pad, O), jnp.float32),
        in_specs=(
            [pl.BlockSpec(memory_space=pltpu.MemorySpace.SMEM)]       # tf_mask
            + [pl.BlockSpec(memory_space=pltpu.MemorySpace.VMEM)] * 13
        ),
        out_specs=pl.BlockSpec(memory_space=pltpu.MemorySpace.VMEM),
    )(
        tf_mask, x_p, y_p,
        params["enc_w_ih"], params["enc_w_hh"], params["enc_b"],
        bridge_w, bridge_b,
        dec_w_x, w_comb, params["dec_b"], bc_x,
        params["dec_w_out"], params["dec_b_out"],
    )
    return out[:, :B, :]


# ------------------------------ param init ------------------------------------
def init_params(key):
    F = Hyperparameter.FEATURE_DIM
    H = Hyperparameter.HIDDEN_DIM
    O = Hyperparameter.OUTPUT_DIM
    ks = jax.random.split(key, 12)
    scale = 0.1

    def rn(k, shape):
        return (scale * jax.random.normal(k, shape)).astype(jnp.float32)

    return {
        # encoder LSTM (F -> H); weights stored as [in, 4H]; b = b_ih + b_hh folded
        "enc_w_ih": rn(ks[0], (F, 4 * H)),
        "enc_w_hh": rn(ks[1], (H, 4 * H)),
        "enc_b": rn(ks[2], (1, 4 * H)),
        # linear bridge: Linear(F, F) then Linear(F, O)
        "lin_w1": rn(ks[3], (F, F)),
        "lin_b1": rn(ks[4], (1, F)),
        "lin_w2": rn(ks[5], (F, O)),
        "lin_b2": rn(ks[6], (1, O)),
        # decoder LSTM cell (input O -> hidden H); b = b_ih + b_hh folded
        "dec_w_ih": rn(ks[7], (O, 4 * H)),
        "dec_w_hh": rn(ks[8], (H, 4 * H)),
        "dec_b": rn(ks[9], (1, 4 * H)),
        # output projection H -> O
        "dec_w_out": rn(ks[10], (H, O)),
        "dec_b_out": rn(ks[11], (1, O)),
    }


# --------------------------------- main ----------------------------------------
if __name__ == "__main__":
    key = jax.random.PRNGKey(0)
    kx, ky, kp, ktf = jax.random.split(key, 4)

    T_in = Hyperparameter.INPUT_SEQ_LEN
    T_out = Hyperparameter.OUTPUT_SEQ_LEN
    B = Hyperparameter.BATCH
    F = Hyperparameter.FEATURE_DIM
    O = Hyperparameter.OUTPUT_DIM

    x = jax.random.normal(kx, (T_in, B, F), dtype=jnp.float32)
    y = jax.random.normal(ky, (T_out, B, O), dtype=jnp.float32)
    params = init_params(kp)

    # Per-call stochastic teacher-forcing schedule (replaces host random.random()).
    tf_mask = (
        jax.random.uniform(ktf, (T_out,)) < Hyperparameter.TEACHER_FORCING_RATIO
    ).astype(jnp.int32)

    fwd = jax.jit(seq2seq_forward)
    outputs = fwd(params, x, y, tf_mask)
    outputs = jax.block_until_ready(outputs)

    assert outputs.shape == (T_out, B, O), outputs.shape
    assert bool(jnp.all(jnp.isfinite(outputs)))
    print("KERNEL_OK")
</pallas_src>

<mosaic_0001>
module attributes {stable_mosaic.version = 11 : i64} {
  func.func @seq2seq_kernel(%arg0: memref<5xi32, #tpu.memory_space<smem>>, %arg1: memref<6x8x8xf32, #tpu.memory_space<vmem>>, %arg2: memref<5x8x8xf32, #tpu.memory_space<vmem>>, %arg3: memref<8x64xf32, #tpu.memory_space<vmem>>, %arg4: memref<16x64xf32, #tpu.memory_space<vmem>>, %arg5: memref<1x64xf32, #tpu.memory_space<vmem>>, %arg6: memref<8x64xf32, #tpu.memory_space<vmem>>, %arg7: memref<1x64xf32, #tpu.memory_space<vmem>>, %arg8: memref<8x64xf32, #tpu.memory_space<vmem>>, %arg9: memref<16x128xf32, #tpu.memory_space<vmem>>, %arg10: memref<1x64xf32, #tpu.memory_space<vmem>>, %arg11: memref<1x64xf32, #tpu.memory_space<vmem>>, %arg12: memref<16x8xf32, #tpu.memory_space<vmem>>, %arg13: memref<1x8xf32, #tpu.memory_space<vmem>>, %arg14: memref<5x8x8xf32, #tpu.memory_space<vmem>>) attributes {dimension_semantics = [], scalar_prefetch = 0 : i64, scratch_operands = 0 : i64, tpu.core_type = #tpu.core_type<tc>} {
    %c0 = arith.constant 0 : index
    %c0_0 = arith.constant 0 : index
    %c0_1 = arith.constant 0 : index
    %0 = vector.load %arg1[%c0, %c0_0, %c0_1] : memref<6x8x8xf32, #tpu.memory_space<vmem>>, vector<6x8x8xf32>
    %1 = vector.shape_cast %0 : vector<6x8x8xf32> to vector<48x8xf32>
    %c0_2 = arith.constant 0 : index
    %c0_3 = arith.constant 0 : index
    %2 = vector.load %arg3[%c0_2, %c0_3] : memref<8x64xf32, #tpu.memory_space<vmem>>, vector<8x64xf32>
    %cst = arith.constant dense<0.000000e+00> : vector<48x64xf32>
    %3 = tpu.matmul %1, %2, %cst {dimension_numbers = #tpu.dot_dimension_numbers<[1], [0], [0], [1], [0, 0, 1, 1], [], []>} : vector<48x8xf32>, vector<8x64xf32>, vector<48x64xf32> -> vector<48x64xf32>
    %c0_4 = arith.constant 0 : index
    %c0_5 = arith.constant 0 : index
    %4 = vector.load %arg5[%c0_4, %c0_5] : memref<1x64xf32, #tpu.memory_space<vmem>>, vector<1x64xf32>
    %5 = vector.broadcast %4 : vector<1x64xf32> to vector<48x64xf32>
    %6 = arith.addf %3, %5 : vector<48x64xf32>
    %c5 = arith.constant 5 : index
    %c0_6 = arith.constant 0 : index
    %c0_7 = arith.constant 0 : index
    %7 = vector.load %arg1[%c5, %c0_6, %c0_7] : memref<6x8x8xf32, #tpu.memory_space<vmem>>, vector<1x8x8xf32>
    %8 = vector.shape_cast %7 : vector<1x8x8xf32> to vector<8x8xf32>
    %c0_8 = arith.constant 0 : index
    %c0_9 = arith.constant 0 : index
    %9 = vector.load %arg6[%c0_8, %c0_9] : memref<8x64xf32, #tpu.memory_space<vmem>>, vector<8x64xf32>
    %cst_10 = arith.constant dense<0.000000e+00> : vector<8x64xf32>
    %10 = tpu.matmul %8, %9, %cst_10 {dimension_numbers = #tpu.dot_dimension_numbers<[1], [0], [0], [1], [0, 0, 1, 1], [], []>} : vector<8x8xf32>, vector<8x64xf32>, vector<8x64xf32> -> vector<8x64xf32>
    %c0_11 = arith.constant 0 : index
    %c0_12 = arith.constant 0 : index
    %11 = vector.load %arg7[%c0_11, %c0_12] : memref<1x64xf32, #tpu.memory_space<vmem>>, vector<1x64xf32>
    %12 = vector.broadcast %11 : vector<1x64xf32> to vector<8x64xf32>
    %13 = arith.addf %10, %12 : vector<8x64xf32>
    %c0_13 = arith.constant 0 : index
    %c0_14 = arith.constant 0 : index
    %c0_15 = arith.constant 0 : index
    %14 = vector.load %arg2[%c0_13, %c0_14, %c0_15] : memref<5x8x8xf32, #tpu.memory_space<vmem>>, vector<4x8x8xf32>
    %15 = vector.shape_cast %14 : vector<4x8x8xf32> to vector<32x8xf32>
    %c0_16 = arith.constant 0 : index
    %c0_17 = arith.constant 0 : index
    %16 = vector.load %arg8[%c0_16, %c0_17] : memref<8x64xf32, #tpu.memory_space<vmem>>, vector<8x64xf32>
    %cst_18 = arith.constant dense<0.000000e+00> : vector<32x64xf32>
    %17 = tpu.matmul %15, %16, %cst_18 {dimension_numbers = #tpu.dot_dimension_numbers<[1], [0], [0], [1], [0, 0, 1, 1], [], []>} : vector<32x8xf32>, vector<8x64xf32>, vector<32x64xf32> -> vector<32x64xf32>
    %c0_19 = arith.constant 0 : index
    %c0_20 = arith.constant 0 : index
    %18 = vector.load %arg4[%c0_19, %c0_20] : memref<16x64xf32, #tpu.memory_space<vmem>>, vector<16x64xf32>
    %cst_21 = arith.constant 0.000000e+00 : f32
    %19 = vector.broadcast %cst_21 : f32 to vector<8x16xf32>
    %cst_22 = arith.constant 0.000000e+00 : f32
    %20 = vector.broadcast %cst_22 : f32 to vector<8x16xf32>
    %21 = vector.extract_strided_slice %6 {offsets = [0, 0], sizes = [8, 64], strides = [1, 1]} : vector<48x64xf32> to vector<8x64xf32>
    %cst_23 = arith.constant dense<0.000000e+00> : vector<8x64xf32>
    %22 = tpu.matmul %19, %18, %cst_23 {dimension_numbers = #tpu.dot_dimension_numbers<[1], [0], [0], [1], [0, 0, 1, 1], [], []>} : vector<8x16xf32>, vector<16x64xf32>, vector<8x64xf32> -> vector<8x64xf32>
    %23 = arith.addf %21, %22 : vector<8x64xf32>
    %24 = arith.negf %23 : vector<8x64xf32>
    %25 = math.exp %24 : vector<8x64xf32>
    %cst_24 = arith.constant 1.000000e+00 : f32
    %26 = vector.broadcast %cst_24 : f32 to vector<8x64xf32>
    %27 = arith.addf %26, %25 : vector<8x64xf32>
    %28 = arith.divf %26, %27 : vector<8x64xf32>
    %29 = math.tanh %23 : vector<8x64xf32>
    %30 = vector.extract_strided_slice %28 {offsets = [0, 0], sizes = [8, 16], strides = [1, 1]} : vector<8x64xf32> to vector<8x16xf32>
    %31 = vector.extract_strided_slice %28 {offsets = [0, 16], sizes = [8, 16], strides = [1, 1]} : vector<8x64xf32> to vector<8x16xf32>
    %32 = vector.extract_strided_slice %29 {offsets = [0, 32], sizes = [8, 16], strides = [1, 1]} : vector<8x64xf32> to vector<8x16xf32>
    %33 = vector.extract_strided_slice %28 {offsets = [0, 48], sizes = [8, 16], strides = [1, 1]} : vector<8x64xf32> to vector<8x16xf32>
    %34 = arith.mulf %31, %20 : vector<8x16xf32>
    %35 = arith.mulf %30, %32 : vector<8x16xf32>
    %36 = arith.addf %34, %35 : vector<8x16xf32>
    %37 = math.tanh %36 : vector<8x16xf32>
    %38 = arith.mulf %33, %37 : vector<8x16xf32>
    %39 = vector.extract_strided_slice %6 {offsets = [8, 0], sizes = [8, 64], strides = [1, 1]} : vector<48x64xf32> to vector<8x64xf32>
    %cst_25 = arith.constant dense<0.000000e+00> : vector<8x64xf32>
    %40 = tpu.matmul %38, %18, %cst_25 {dimension_numbers = #tpu.dot_dimension_numbers<[1], [0], [0], [1], [0, 0, 1, 1], [], []>} : vector<8x16xf32>, vector<16x64xf32>, vector<8x64xf32> -> vector<8x64xf32>
    %41 = arith.addf %39, %40 : vector<8x64xf32>
    %42 = arith.negf %41 : vector<8x64xf32>
    %43 = math.exp %42 : vector<8x64xf32>
    %cst_26 = arith.constant 1.000000e+00 : f32
    %44 = vector.broadcast %cst_26 : f32 to vector<8x64xf32>
    %45 = arith.addf %44, %43 : vector<8x64xf32>
    %46 = arith.divf %44, %45 : vector<8x64xf32>
    %47 = math.tanh %41 : vector<8x64xf32>
    %48 = vector.extract_strided_slice %46 {offsets = [0, 0], sizes = [8, 16], strides = [1, 1]} : vector<8x64xf32> to vector<8x16xf32>
    %49 = vector.extract_strided_slice %46 {offsets = [0, 16], sizes = [8, 16], strides = [1, 1]} : vector<8x64xf32> to vector<8x16xf32>
    %50 = vector.extract_strided_slice %47 {offsets = [0, 32], sizes = [8, 16], strides = [1, 1]} : vector<8x64xf32> to vector<8x16xf32>
    %51 = vector.extract_strided_slice %46 {offsets = [0, 48], sizes = [8, 16], strides = [1, 1]} : vector<8x64xf32> to vector<8x16xf32>
    %52 = arith.mulf %49, %36 : vector<8x16xf32>
    %53 = arith.mulf %48, %50 : vector<8x16xf32>
    %54 = arith.addf %52, %53 : vector<8x16xf32>
    %55 = math.tanh %54 : vector<8x16xf32>
    %56 = arith.mulf %51, %55 : vector<8x16xf32>
    %57 = vector.extract_strided_slice %6 {offsets = [16, 0], sizes = [8, 64], strides = [1, 1]} : vector<48x64xf32> to vector<8x64xf32>
    %cst_27 = arith.constant dense<0.000000e+00> : vector<8x64xf32>
    %58 = tpu.matmul %56, %18, %cst_27 {dimension_numbers = #tpu.dot_dimension_numbers<[1], [0], [0], [1], [0, 0, 1, 1], [], []>} : vector<8x16xf32>, vector<16x64xf32>, vector<8x64xf32> -> vector<8x64xf32>
    %59 = arith.addf %57, %58 : vector<8x64xf32>
    %60 = arith.negf %59 : vector<8x64xf32>
    %61 = math.exp %60 : vector<8x64xf32>
    %cst_28 = arith.constant 1.000000e+00 : f32
    %62 = vector.broadcast %cst_28 : f32 to vector<8x64xf32>
    %63 = arith.addf %62, %61 : vector<8x64xf32>
    %64 = arith.divf %62, %63 : vector<8x64xf32>
    %65 = math.tanh %59 : vector<8x64xf32>
    %66 = vector.extract_strided_slice %64 {offsets = [0, 0], sizes = [8, 16], strides = [1, 1]} : vector<8x64xf32> to vector<8x16xf32>
    %67 = vector.extract_strided_slice %64 {offsets = [0, 16], sizes = [8, 16], strides = [1, 1]} : vector<8x64xf32> to vector<8x16xf32>
    %68 = vector.extract_strided_slice %65 {offsets = [0, 32], sizes = [8, 16], strides = [1, 1]} : vector<8x64xf32> to vector<8x16xf32>
    %69 = vector.extract_strided_slice %64 {offsets = [0, 48], sizes = [8, 16], strides = [1, 1]} : vector<8x64xf32> to vector<8x16xf32>
    %70 = arith.mulf %67, %54 : vector<8x16xf32>
    %71 = arith.mulf %66, %68 : vector<8x16xf32>
    %72 = arith.addf %70, %71 : vector<8x16xf32>
    %73 = math.tanh %72 : vector<8x16xf32>
    %74 = arith.mulf %69, %73 : vector<8x16xf32>
    %75 = vector.extract_strided_slice %6 {offsets = [24, 0], sizes = [8, 64], strides = [1, 1]} : vector<48x64xf32> to vector<8x64xf32>
    %cst_29 = arith.constant dense<0.000000e+00> : vector<8x64xf32>
    %76 = tpu.matmul %74, %18, %cst_29 {dimension_numbers = #tpu.dot_dimension_numbers<[1], [0], [0], [1], [0, 0, 1, 1], [], []>} : vector<8x16xf32>, vector<16x64xf32>, vector<8x64xf32> -> vector<8x64xf32>
    %77 = arith.addf %75, %76 : vector<8x64xf32>
    %78 = arith.negf %77 : vector<8x64xf32>
    %79 = math.exp %78 : vector<8x64xf32>
    %cst_30 = arith.constant 1.000000e+00 : f32
    %80 = vector.broadcast %cst_30 : f32 to vector<8x64xf32>
    %81 = arith.addf %80, %79 : vector<8x64xf32>
    %82 = arith.divf %80, %81 : vector<8x64xf32>
    %83 = math.tanh %77 : vector<8x64xf32>
    %84 = vector.extract_strided_slice %82 {offsets = [0, 0], sizes = [8, 16], strides = [1, 1]} : vector<8x64xf32> to vector<8x16xf32>
    %85 = vector.extract_strided_slice %82 {offsets = [0, 16], sizes = [8, 16], strides = [1, 1]} : vector<8x64xf32> to vector<8x16xf32>
    %86 = vector.extract_strided_slice %83 {offsets = [0, 32], sizes = [8, 16], strides = [1, 1]} : vector<8x64xf32> to vector<8x16xf32>
    %87 = vector.extract_strided_slice %82 {offsets = [0, 48], sizes = [8, 16], strides = [1, 1]} : vector<8x64xf32> to vector<8x16xf32>
    %88 = arith.mulf %85, %72 : vector<8x16xf32>
    %89 = arith.mulf %84, %86 : vector<8x16xf32>
    %90 = arith.addf %88, %89 : vector<8x16xf32>
    %91 = math.tanh %90 : vector<8x16xf32>
    %92 = arith.mulf %87, %91 : vector<8x16xf32>
    %93 = vector.extract_strided_slice %6 {offsets = [32, 0], sizes = [8, 64], strides = [1, 1]} : vector<48x64xf32> to vector<8x64xf32>
    %cst_31 = arith.constant dense<0.000000e+00> : vector<8x64xf32>
    %94 = tpu.matmul %92, %18, %cst_31 {dimension_numbers = #tpu.dot_dimension_numbers<[1], [0], [0], [1], [0, 0, 1, 1], [], []>} : vector<8x16xf32>, vector<16x64xf32>, vector<8x64xf32> -> vector<8x64xf32>
    %95 = arith.addf %93, %94 : vector<8x64xf32>
    %96 = arith.negf %95 : vector<8x64xf32>
    %97 = math.exp %96 : vector<8x64xf32>
    %cst_32 = arith.constant 1.000000e+00 : f32
    %98 = vector.broadcast %cst_32 : f32 to vector<8x64xf32>
    %99 = arith.addf %98, %97 : vector<8x64xf32>
    %100 = arith.divf %98, %99 : vector<8x64xf32>
    %101 = math.tanh %95 : vector<8x64xf32>
    %102 = vector.extract_strided_slice %100 {offsets = [0, 0], sizes = [8, 16], strides = [1, 1]} : vector<8x64xf32> to vector<8x16xf32>
    %103 = vector.extract_strided_slice %100 {offsets = [0, 16], sizes = [8, 16], strides = [1, 1]} : vector<8x64xf32> to vector<8x16xf32>
    %104 = vector.extract_strided_slice %101 {offsets = [0, 32], sizes = [8, 16], strides = [1, 1]} : vector<8x64xf32> to vector<8x16xf32>
    %105 = vector.extract_strided_slice %100 {offsets = [0, 48], sizes = [8, 16], strides = [1, 1]} : vector<8x64xf32> to vector<8x16xf32>
    %106 = arith.mulf %103, %90 : vector<8x16xf32>
    %107 = arith.mulf %102, %104 : vector<8x16xf32>
    %108 = arith.addf %106, %107 : vector<8x16xf32>
    %109 = math.tanh %108 : vector<8x16xf32>
    %110 = arith.mulf %105, %109 : vector<8x16xf32>
    %111 = vector.extract_strided_slice %6 {offsets = [40, 0], sizes = [8, 64], strides = [1, 1]} : vector<48x64xf32> to vector<8x64xf32>
    %cst_33 = arith.constant dense<0.000000e+00> : vector<8x64xf32>
    %112 = tpu.matmul %110, %18, %cst_33 {dimension_numbers = #tpu.dot_dimension_numbers<[1], [0], [0], [1], [0, 0, 1, 1], [], []>} : vector<8x16xf32>, vector<16x64xf32>, vector<8x64xf32> -> vector<8x64xf32>
    %113 = arith.addf %111, %112 : vector<8x64xf32>
    %114 = arith.negf %113 : vector<8x64xf32>
    %115 = math.exp %114 : vector<8x64xf32>
    %cst_34 = arith.constant 1.000000e+00 : f32
    %116 = vector.broadcast %cst_34 : f32 to vector<8x64xf32>
    %117 = arith.addf %116, %115 : vector<8x64xf32>
    %118 = arith.divf %116, %117 : vector<8x64xf32>
    %119 = math.tanh %113 : vector<8x64xf32>
    %120 = vector.extract_strided_slice %118 {offsets = [0, 0], sizes = [8, 16], strides = [1, 1]} : vector<8x64xf32> to vector<8x16xf32>
    %121 = vector.extract_strided_slice %118 {offsets = [0, 16], sizes = [8, 16], strides = [1, 1]} : vector<8x64xf32> to vector<8x16xf32>
    %122 = vector.extract_strided_slice %119 {offsets = [0, 32], sizes = [8, 16], strides = [1, 1]} : vector<8x64xf32> to vector<8x16xf32>
    %123 = vector.extract_strided_slice %118 {offsets = [0, 48], sizes = [8, 16], strides = [1, 1]} : vector<8x64xf32> to vector<8x16xf32>
    %124 = arith.mulf %121, %108 : vector<8x16xf32>
    %125 = arith.mulf %120, %122 : vector<8x16xf32>
    %126 = arith.addf %124, %125 : vector<8x16xf32>
    %127 = math.tanh %126 : vector<8x16xf32>
    %128 = arith.mulf %123, %127 : vector<8x16xf32>
    %c0_35 = arith.constant 0 : index
    %c0_36 = arith.constant 0 : index
    %129 = vector.load %arg9[%c0_35, %c0_36] : memref<16x128xf32, #tpu.memory_space<vmem>>, vector<16x128xf32>
    %c0_37 = arith.constant 0 : index
    %c0_38 = arith.constant 0 : index
    %130 = vector.load %arg10[%c0_37, %c0_38] : memref<1x64xf32, #tpu.memory_space<vmem>>, vector<1x64xf32>
    %131 = vector.shape_cast %130 : vector<1x64xf32> to vector<1x64xf32>
    %132 = vector.broadcast %131 : vector<1x64xf32> to vector<8x64xf32>
    %c0_39 = arith.constant 0 : index
    %c0_40 = arith.constant 0 : index
    %133 = vector.load %arg11[%c0_39, %c0_40] : memref<1x64xf32, #tpu.memory_space<vmem>>, vector<1x64xf32>
    %134 = vector.shape_cast %133 : vector<1x64xf32> to vector<1x64xf32>
    %135 = vector.broadcast %134 : vector<1x64xf32> to vector<8x64xf32>
    %cst_41 = arith.constant dense<0.000000e+00> : vector<8x128xf32>
    %136 = tpu.matmul %128, %129, %cst_41 {dimension_numbers = #tpu.dot_dimension_numbers<[1], [0], [0], [1], [0, 0, 1, 1], [], []>} : vector<8x16xf32>, vector<16x128xf32>, vector<8x128xf32> -> vector<8x128xf32>
    %137 = vector.extract_strided_slice %136 {offsets = [0, 0], sizes = [8, 64], strides = [1, 1]} : vector<8x128xf32> to vector<8x64xf32>
    %138 = arith.addf %13, %137 : vector<8x64xf32>
    %139 = arith.addf %138, %132 : vector<8x64xf32>
    %140 = arith.negf %139 : vector<8x64xf32>
    %141 = math.exp %140 : vector<8x64xf32>
    %cst_42 = arith.constant 1.000000e+00 : f32
    %142 = vector.broadcast %cst_42 : f32 to vector<8x64xf32>
    %143 = arith.addf %142, %141 : vector<8x64xf32>
    %144 = arith.divf %142, %143 : vector<8x64xf32>
    %145 = math.tanh %139 : vector<8x64xf32>
    %146 = vector.extract_strided_slice %144 {offsets = [0, 0], sizes = [8, 16], strides = [1, 1]} : vector<8x64xf32> to vector<8x16xf32>
    %147 = vector.extract_strided_slice %144 {offsets = [0, 16], sizes = [8, 16], strides = [1, 1]} : vector<8x64xf32> to vector<8x16xf32>
    %148 = vector.extract_strided_slice %145 {offsets = [0, 32], sizes = [8, 16], strides = [1, 1]} : vector<8x64xf32> to vector<8x16xf32>
    %149 = vector.extract_strided_slice %144 {offsets = [0, 48], sizes = [8, 16], strides = [1, 1]} : vector<8x64xf32> to vector<8x16xf32>
    %150 = arith.mulf %147, %126 : vector<8x16xf32>
    %151 = arith.mulf %146, %148 : vector<8x16xf32>
    %152 = arith.addf %150, %151 : vector<8x16xf32>
    %153 = math.tanh %152 : vector<8x16xf32>
    %154 = arith.mulf %149, %153 : vector<8x16xf32>
    %cst_43 = arith.constant dense<0.000000e+00> : vector<8x128xf32>
    %155 = tpu.matmul %154, %129, %cst_43 {dimension_numbers = #tpu.dot_dimension_numbers<[1], [0], [0], [1], [0, 0, 1, 1], [], []>} : vector<8x16xf32>, vector<16x128xf32>, vector<8x128xf32> -> vector<8x128xf32>
    %c0_44 = arith.constant 0 : index
    %156 = memref.load %arg0[%c0_44] : memref<5xi32, #tpu.memory_space<smem>>
    %157 = arith.sitofp %156 : i32 to f32
    %158 = vector.extract_strided_slice %17 {offsets = [0, 0], sizes = [8, 64], strides = [1, 1]} : vector<32x64xf32> to vector<8x64xf32>
    %159 = vector.broadcast %157 : f32 to vector<8x64xf32>
    %160 = arith.mulf %159, %158 : vector<8x64xf32>
    %cst_45 = arith.constant 1.000000e+00 : f32
    %161 = arith.subf %cst_45, %157 : f32
    %162 = vector.extract_strided_slice %155 {offsets = [0, 64], sizes = [8, 64], strides = [1, 1]} : vector<8x128xf32> to vector<8x64xf32>
    %163 = arith.addf %162, %135 : vector<8x64xf32>
    %164 = vector.broadcast %161 : f32 to vector<8x64xf32>
    %165 = arith.mulf %164, %163 : vector<8x64xf32>
    %166 = arith.addf %160, %165 : vector<8x64xf32>
    %167 = vector.extract_strided_slice %155 {offsets = [0, 0], sizes = [8, 64], strides = [1, 1]} : vector<8x128xf32> to vector<8x64xf32>
    %168 = arith.addf %166, %167 : vector<8x64xf32>
    %169 = arith.addf %168, %132 : vector<8x64xf32>
    %170 = arith.negf %169 : vector<8x64xf32>
    %171 = math.exp %170 : vector<8x64xf32>
    %cst_46 = arith.constant 1.000000e+00 : f32
    %172 = vector.broadcast %cst_46 : f32 to vector<8x64xf32>
    %173 = arith.addf %172, %171 : vector<8x64xf32>
    %174 = arith.divf %172, %173 : vector<8x64xf32>
    %175 = math.tanh %169 : vector<8x64xf32>
    %176 = vector.extract_strided_slice %174 {offsets = [0, 0], sizes = [8, 16], strides = [1, 1]} : vector<8x64xf32> to vector<8x16xf32>
    %177 = vector.extract_strided_slice %174 {offsets = [0, 16], sizes = [8, 16], strides = [1, 1]} : vector<8x64xf32> to vector<8x16xf32>
    %178 = vector.extract_strided_slice %175 {offsets = [0, 32], sizes = [8, 16], strides = [1, 1]} : vector<8x64xf32> to vector<8x16xf32>
    %179 = vector.extract_strided_slice %174 {offsets = [0, 48], sizes = [8, 16], strides = [1, 1]} : vector<8x64xf32> to vector<8x16xf32>
    %180 = arith.mulf %177, %152 : vector<8x16xf32>
    %181 = arith.mulf %176, %178 : vector<8x16xf32>
    %182 = arith.addf %180, %181 : vector<8x16xf32>
    %183 = math.tanh %182 : vector<8x16xf32>
    %184 = arith.mulf %179, %183 : vector<8x16xf32>
    %cst_47 = arith.constant dense<0.000000e+00> : vector<8x128xf32>
    %185 = tpu.matmul %184, %129, %cst_47 {dimension_numbers = #tpu.dot_dimension_numbers<[1], [0], [0], [1], [0, 0, 1, 1], [], []>} : vector<8x16xf32>, vector<16x128xf32>, vector<8x128xf32> -> vector<8x128xf32>
    %c1 = arith.constant 1 : index
    %186 = memref.load %arg0[%c1] : memref<5xi32, #tpu.memory_space<smem>>
    %187 = arith.sitofp %186 : i32 to f32
    %188 = vector.extract_strided_slice %17 {offsets = [8, 0], sizes = [8, 64], strides = [1, 1]} : vector<32x64xf32> to vector<8x64xf32>
    %189 = vector.broadcast %187 : f32 to vector<8x64xf32>
    %190 = arith.mulf %189, %188 : vector<8x64xf32>
    %cst_48 = arith.constant 1.000000e+00 : f32
    %191 = arith.subf %cst_48, %187 : f32
    %192 = vector.extract_strided_slice %185 {offsets = [0, 64], sizes = [8, 64], strides = [1, 1]} : vector<8x128xf32> to vector<8x64xf32>
    %193 = arith.addf %192, %135 : vector<8x64xf32>
    %194 = vector.broadcast %191 : f32 to vector<8x64xf32>
    %195 = arith.mulf %194, %193 : vector<8x64xf32>
    %196 = arith.addf %190, %195 : vector<8x64xf32>
    %197 = vector.extract_strided_slice %185 {offsets = [0, 0], sizes = [8, 64], strides = [1, 1]} : vector<8x128xf32> to vector<8x64xf32>
    %198 = arith.addf %196, %197 : vector<8x64xf32>
    %199 = arith.addf %198, %132 : vector<8x64xf32>
    %200 = arith.negf %199 : vector<8x64xf32>
    %201 = math.exp %200 : vector<8x64xf32>
    %cst_49 = arith.constant 1.000000e+00 : f32
    %202 = vector.broadcast %cst_49 : f32 to vector<8x64xf32>
    %203 = arith.addf %202, %201 : vector<8x64xf32>
    %204 = arith.divf %202, %203 : vector<8x64xf32>
    %205 = math.tanh %199 : vector<8x64xf32>
    %206 = vector.extract_strided_slice %204 {offsets = [0, 0], sizes = [8, 16], strides = [1, 1]} : vector<8x64xf32> to vector<8x16xf32>
    %207 = vector.extract_strided_slice %204 {offsets = [0, 16], sizes = [8, 16], strides = [1, 1]} : vector<8x64xf32> to vector<8x16xf32>
    %208 = vector.extract_strided_slice %205 {offsets = [0, 32], sizes = [8, 16], strides = [1, 1]} : vector<8x64xf32> to vector<8x16xf32>
    %209 = vector.extract_strided_slice %204 {offsets = [0, 48], sizes = [8, 16], strides = [1, 1]} : vector<8x64xf32> to vector<8x16xf32>
    %210 = arith.mulf %207, %182 : vector<8x16xf32>
    %211 = arith.mulf %206, %208 : vector<8x16xf32>
    %212 = arith.addf %210, %211 : vector<8x16xf32>
    %213 = math.tanh %212 : vector<8x16xf32>
    %214 = arith.mulf %209, %213 : vector<8x16xf32>
    %cst_50 = arith.constant dense<0.000000e+00> : vector<8x128xf32>
    %215 = tpu.matmul %214, %129, %cst_50 {dimension_numbers = #tpu.dot_dimension_numbers<[1], [0], [0], [1], [0, 0, 1, 1], [], []>} : vector<8x16xf32>, vector<16x128xf32>, vector<8x128xf32> -> vector<8x128xf32>
    %c2 = arith.constant 2 : index
    %216 = memref.load %arg0[%c2] : memref<5xi32, #tpu.memory_space<smem>>
    %217 = arith.sitofp %216 : i32 to f32
    %218 = vector.extract_strided_slice %17 {offsets = [16, 0], sizes = [8, 64], strides = [1, 1]} : vector<32x64xf32> to vector<8x64xf32>
    %219 = vector.broadcast %217 : f32 to vector<8x64xf32>
    %220 = arith.mulf %219, %218 : vector<8x64xf32>
    %cst_51 = arith.constant 1.000000e+00 : f32
    %221 = arith.subf %cst_51, %217 : f32
    %222 = vector.extract_strided_slice %215 {offsets = [0, 64], sizes = [8, 64], strides = [1, 1]} : vector<8x128xf32> to vector<8x64xf32>
    %223 = arith.addf %222, %135 : vector<8x64xf32>
    %224 = vector.broadcast %221 : f32 to vector<8x64xf32>
    %225 = arith.mulf %224, %223 : vector<8x64xf32>
    %226 = arith.addf %220, %225 : vector<8x64xf32>
    %227 = vector.extract_strided_slice %215 {offsets = [0, 0], sizes = [8, 64], strides = [1, 1]} : vector<8x128xf32> to vector<8x64xf32>
    %228 = arith.addf %226, %227 : vector<8x64xf32>
    %229 = arith.addf %228, %132 : vector<8x64xf32>
    %230 = arith.negf %229 : vector<8x64xf32>
    %231 = math.exp %230 : vector<8x64xf32>
    %cst_52 = arith.constant 1.000000e+00 : f32
    %232 = vector.broadcast %cst_52 : f32 to vector<8x64xf32>
    %233 = arith.addf %232, %231 : vector<8x64xf32>
    %234 = arith.divf %232, %233 : vector<8x64xf32>
    %235 = math.tanh %229 : vector<8x64xf32>
    %236 = vector.extract_strided_slice %234 {offsets = [0, 0], sizes = [8, 16], strides = [1, 1]} : vector<8x64xf32> to vector<8x16xf32>
    %237 = vector.extract_strided_slice %234 {offsets = [0, 16], sizes = [8, 16], strides = [1, 1]} : vector<8x64xf32> to vector<8x16xf32>
    %238 = vector.extract_strided_slice %235 {offsets = [0, 32], sizes = [8, 16], strides = [1, 1]} : vector<8x64xf32> to vector<8x16xf32>
    %239 = vector.extract_strided_slice %234 {offsets = [0, 48], sizes = [8, 16], strides = [1, 1]} : vector<8x64xf32> to vector<8x16xf32>
    %240 = arith.mulf %237, %212 : vector<8x16xf32>
    %241 = arith.mulf %236, %238 : vector<8x16xf32>
    %242 = arith.addf %240, %241 : vector<8x16xf32>
    %243 = math.tanh %242 : vector<8x16xf32>
    %244 = arith.mulf %239, %243 : vector<8x16xf32>
    %cst_53 = arith.constant dense<0.000000e+00> : vector<8x128xf32>
    %245 = tpu.matmul %244, %129, %cst_53 {dimension_numbers = #tpu.dot_dimension_numbers<[1], [0], [0], [1], [0, 0, 1, 1], [], []>} : vector<8x16xf32>, vector<16x128xf32>, vector<8x128xf32> -> vector<8x128xf32>
    %c3 = arith.constant 3 : index
    %246 = memref.load %arg0[%c3] : memref<5xi32, #tpu.memory_space<smem>>
    %247 = arith.sitofp %246 : i32 to f32
    %248 = vector.extract_strided_slice %17 {offsets = [24, 0], sizes = [8, 64], strides = [1, 1]} : vector<32x64xf32> to vector<8x64xf32>
    %249 = vector.broadcast %247 : f32 to vector<8x64xf32>
    %250 = arith.mulf %249, %248 : vector<8x64xf32>
    %cst_54 = arith.constant 1.000000e+00 : f32
    %251 = arith.subf %cst_54, %247 : f32
    %252 = vector.extract_strided_slice %245 {offsets = [0, 64], sizes = [8, 64], strides = [1, 1]} : vector<8x128xf32> to vector<8x64xf32>
    %253 = arith.addf %252, %135 : vector<8x64xf32>
    %254 = vector.broadcast %251 : f32 to vector<8x64xf32>
    %255 = arith.mulf %254, %253 : vector<8x64xf32>
    %256 = arith.addf %250, %255 : vector<8x64xf32>
    %257 = vector.extract_strided_slice %245 {offsets = [0, 0], sizes = [8, 64], strides = [1, 1]} : vector<8x128xf32> to vector<8x64xf32>
    %258 = arith.addf %256, %257 : vector<8x64xf32>
    %259 = arith.addf %258, %132 : vector<8x64xf32>
    %260 = arith.negf %259 : vector<8x64xf32>
    %261 = math.exp %260 : vector<8x64xf32>
    %cst_55 = arith.constant 1.000000e+00 : f32
    %262 = vector.broadcast %cst_55 : f32 to vector<8x64xf32>
    %263 = arith.addf %262, %261 : vector<8x64xf32>
    %264 = arith.divf %262, %263 : vector<8x64xf32>
    %265 = math.tanh %259 : vector<8x64xf32>
    %266 = vector.extract_strided_slice %264 {offsets = [0, 0], sizes = [8, 16], strides = [1, 1]} : vector<8x64xf32> to vector<8x16xf32>
    %267 = vector.extract_strided_slice %264 {offsets = [0, 16], sizes = [8, 16], strides = [1, 1]} : vector<8x64xf32> to vector<8x16xf32>
    %268 = vector.extract_strided_slice %265 {offsets = [0, 32], sizes = [8, 16], strides = [1, 1]} : vector<8x64xf32> to vector<8x16xf32>
    %269 = vector.extract_strided_slice %264 {offsets = [0, 48], sizes = [8, 16], strides = [1, 1]} : vector<8x64xf32> to vector<8x16xf32>
    %270 = arith.mulf %267, %242 : vector<8x16xf32>
    %271 = arith.mulf %266, %268 : vector<8x16xf32>
    %272 = arith.addf %270, %271 : vector<8x16xf32>
    %273 = math.tanh %272 : vector<8x16xf32>
    %274 = arith.mulf %269, %273 : vector<8x16xf32>
    %275 = tpu.concatenate %154, %184, %214, %244, %274 in 0 : vector<8x16xf32>, vector<8x16xf32>, vector<8x16xf32>, vector<8x16xf32>, vector<8x16xf32> -> vector<40x16xf32>
    %c0_56 = arith.constant 0 : index
    %c0_57 = arith.constant 0 : index
    %276 = vector.load %arg12[%c0_56, %c0_57] : memref<16x8xf32, #tpu.memory_space<vmem>>, vector<16x8xf32>
    %cst_58 = arith.constant dense<0.000000e+00> : vector<40x8xf32>
    %277 = tpu.matmul %275, %276, %cst_58 {dimension_numbers = #tpu.dot_dimension_numbers<[1], [0], [0], [1], [0, 0, 1, 1], [], []>} : vector<40x16xf32>, vector<16x8xf32>, vector<40x8xf32> -> vector<40x8xf32>
    %c0_59 = arith.constant 0 : index
    %c0_60 = arith.constant 0 : index
    %278 = vector.load %arg13[%c0_59, %c0_60] : memref<1x8xf32, #tpu.memory_space<vmem>>, vector<1x8xf32>
    %279 = vector.broadcast %278 : vector<1x8xf32> to vector<40x8xf32>
    %280 = arith.addf %277, %279 : vector<40x8xf32>
    %281 = vector.shape_cast %280 : vector<40x8xf32> to vector<5x8x8xf32>
    %c0_61 = arith.constant 0 : index
    %c0_62 = arith.constant 0 : index
    %c0_63 = arith.constant 0 : index
    %282 = vector.load %arg14[%c0_61, %c0_62, %c0_63] : memref<5x8x8xf32, #tpu.memory_space<vmem>>, vector<5x8x8xf32>
    tpu.vector_store %arg14[%c0_61, %c0_62, %c0_63], %281 {strides = array<i32>} : memref<5x8x8xf32, #tpu.memory_space<vmem>>, vector<5x8x8xf32>,
    return
  }
}

</mosaic_0001>

<llo_original>
// kernel: seq2seq_forward.1
$region0: #{seq2seq_forward.1}
  #allocation0 [shape = 'u32[]', space=smem, size = 0x4, offset = 0x4, fixed_abs, tag = 'smem constant byte address 0x4 - core index']
  #allocation1 [shape = 'u32[72,128]{1,0:T(1,128)}', space=vmem, size = 0x9000, scoped, tag = 'internal scratch']
  %s0 = inlined_call_operand.vmem [shape: s32[5], index: 0, kind: input, shape index: {}]
  %s1 = inlined_call_operand.vmem [shape: f32[6,8,8], index: 1, kind: input, shape index: {}]
  %s2 = inlined_call_operand.vmem [shape: f32[5,8,8], index: 2, kind: input, shape index: {}]
  %s3 = inlined_call_operand.vmem [shape: f32[8,64], index: 3, kind: input, shape index: {}]
  %s4 = inlined_call_operand.vmem [shape: f32[16,64], index: 4, kind: input, shape index: {}]
  %s5 = inlined_call_operand.vmem [shape: f32[1,64], index: 5, kind: input, shape index: {}]
  %s6 = inlined_call_operand.vmem [shape: f32[8,64], index: 6, kind: input, shape index: {}]
  %s7 = inlined_call_operand.vmem [shape: f32[1,64], index: 7, kind: input, shape index: {}]
  %s8 = inlined_call_operand.vmem [shape: f32[8,64], index: 8, kind: input, shape index: {}]
  %s9 = inlined_call_operand.vmem [shape: f32[16,128], index: 9, kind: input, shape index: {}]
  %s10 = inlined_call_operand.vmem [shape: f32[1,64], index: 10, kind: input, shape index: {}]
  %s11 = inlined_call_operand.vmem [shape: f32[1,64], index: 11, kind: input, shape index: {}]
  %s12 = inlined_call_operand.vmem [shape: f32[16,8], index: 12, kind: input, shape index: {}]
  %s13 = inlined_call_operand.vmem [shape: f32[1,8], index: 13, kind: input, shape index: {}]
  %s14 = inlined_call_operand.vmem [shape: f32[5,8,8], index: 14, kind: output, shape index: {}]
  %s15 = sld [smem:[#allocation0]]
  $region70: #{seq2seq_forward.1} parent=0
    _
  %s17 = ssub.s32 1, %s15
  %s18 = scalar_select 0, %s17, %s15
  $region1: #{seq2seq_forward.1} parent=0
    #allocation2 [shape = 'u8[512]{0}', space=smem, size = 0x200, scoped, tag = 'input window, operand 0, single buffered']
    #allocation3 [shape = 's32[1]{0}', space=sflag, size = 0x4, scoped, tag = 'scoped memory for seq2seq_forward.1']
    %19 = vsyncpa [#allocation3], 0
    // Predicated region
    $region2: #{seq2seq_forward.1} parent=1 // pred_check
      _
    $region3: #{seq2seq_forward.1} parent=1 // pred_check_branch
      %21 = sbr.rel (0) target = $region5
    $region4: #{seq2seq_forward.1} parent=1 // pred_region
      %23 = vsyncadd [#allocation3], 0
      %s25 = sshll.u32 %s0, 4
      %s26 = int_to_ptr.vmem [resolvable:$true] %s25
      %28 = dma.vmem_to_smem %s26, 16, [#allocation2], [#allocation3]
    $region5: #{seq2seq_forward.1} parent=1 // pred_fallthru
      _
    // Predicated region
    $region6: #{seq2seq_forward.1} parent=1 // pred_check
      _
    $region7: #{seq2seq_forward.1} parent=1 // pred_check_branch
      %30 = sbr.rel (0) target = $region9
    $region8: #{seq2seq_forward.1} parent=1 // pred_region
      _
    $region9: #{seq2seq_forward.1} parent=1 // pred_fallthru
      _
    // Predicated region
    $region10: #{seq2seq_forward.1} parent=1 // pred_check
      _
    $region11: #{seq2seq_forward.1} parent=1 // pred_check_branch
      %32 = sbr.rel (0) target = $region13
    $region12: #{seq2seq_forward.1} parent=1 // pred_region
      _
    $region13: #{seq2seq_forward.1} parent=1 // pred_fallthru
      _
    // Predicated region
    $region14: #{seq2seq_forward.1} parent=1 // pred_check
      _
    $region15: #{seq2seq_forward.1} parent=1 // pred_check_branch
      %34 = sbr.rel (0) target = $region17
    $region16: #{seq2seq_forward.1} parent=1 // pred_region
      _
    $region17: #{seq2seq_forward.1} parent=1 // pred_fallthru
      _
    // Predicated region
    $region18: #{seq2seq_forward.1} parent=1 // pred_check
      _
    $region19: #{seq2seq_forward.1} parent=1 // pred_check_branch
      %36 = sbr.rel (0) target = $region21
    $region20: #{seq2seq_forward.1} parent=1 // pred_region
      _
    $region21: #{seq2seq_forward.1} parent=1 // pred_fallthru
      _
    // Predicated region
    $region22: #{seq2seq_forward.1} parent=1 // pred_check
      _
    $region23: #{seq2seq_forward.1} parent=1 // pred_check_branch
      %38 = sbr.rel (0) target = $region25
    $region24: #{seq2seq_forward.1} parent=1 // pred_region
      _
    $region25: #{seq2seq_forward.1} parent=1 // pred_fallthru
      _
    // Predicated region
    $region26: #{seq2seq_forward.1} parent=1 // pred_check
      _
    $region27: #{seq2seq_forward.1} parent=1 // pred_check_branch
      %40 = sbr.rel (0) target = $region29
    $region28: #{seq2seq_forward.1} parent=1 // pred_region
      _
    $region29: #{seq2seq_forward.1} parent=1 // pred_fallthru
      _
    // Predicated region
    $region30: #{seq2seq_forward.1} parent=1 // pred_check
      _
    $region31: #{seq2seq_forward.1} parent=1 // pred_check_branch
      %42 = sbr.rel (0) target = $region33
    $region32: #{seq2seq_forward.1} parent=1 // pred_region
      _
    $region33: #{seq2seq_forward.1} parent=1 // pred_fallthru
      _
    // Predicated region
    $region34: #{seq2seq_forward.1} parent=1 // pred_check
      _
    $region35: #{seq2seq_forward.1} parent=1 // pred_check_branch
      %44 = sbr.rel (0) target = $region37
    $region36: #{seq2seq_forward.1} parent=1 // pred_region
      _
    $region37: #{seq2seq_forward.1} parent=1 // pred_fallthru
      _
    // Predicated region
    $region38: #{seq2seq_forward.1} parent=1 // pred_check
      _
    $region39: #{seq2seq_forward.1} parent=1 // pred_check_branch
      %46 = sbr.rel (0) target = $region41
    $region40: #{seq2seq_forward.1} parent=1 // pred_region
      _
    $region41: #{seq2seq_forward.1} parent=1 // pred_fallthru
      _
    // Predicated region
    $region42: #{seq2seq_forward.1} parent=1 // pred_check
      _
    $region43: #{seq2seq_forward.1} parent=1 // pred_check_branch
      %48 = sbr.rel (0) target = $region45
    $region44: #{seq2seq_forward.1} parent=1 // pred_region
      _
    $region45: #{seq2seq_forward.1} parent=1 // pred_fallthru
      _
    // Predicated region
    $region46: #{seq2seq_forward.1} parent=1 // pred_check
      _
    $region47: #{seq2seq_forward.1} parent=1 // pred_check_branch
      %50 = sbr.rel (0) target = $region49
    $region48: #{seq2seq_forward.1} parent=1 // pred_region
      _
    $region49: #{seq2seq_forward.1} parent=1 // pred_fallthru
      _
    // Predicated region
    $region50: #{seq2seq_forward.1} parent=1 // pred_check
      _
    $region51: #{seq2seq_forward.1} parent=1 // pred_check_branch
      %52 = sbr.rel (0) target = $region53
    $region52: #{seq2seq_forward.1} parent=1 // pred_region
      _
    $region53: #{seq2seq_forward.1} parent=1 // pred_fallthru
      _
    // Predicated region
    $region54: #{seq2seq_forward.1} parent=1 // pred_check
      _
    $region55: #{seq2seq_forward.1} parent=1 // pred_check_branch
      %54 = sbr.rel (0) target = $region57
    $region56: #{seq2seq_forward.1} parent=1 // pred_region
      _
    $region57: #{seq2seq_forward.1} parent=1 // pred_fallthru
      _
    // Predicated region
    $region58: #{seq2seq_forward.1} parent=1 // pred_check
      _
    $region59: #{seq2seq_forward.1} parent=1 // pred_check_branch
      %56 = sbr.rel (0) target = $region61
    $region60: #{seq2seq_forward.1} parent=1 // pred_region
      %58 = dma.done [#allocation3], 16
    $region61: #{seq2seq_forward.1} parent=1 // pred_fallthru
      _
    %59 = sfence
    %v60 = vld [vmem:[%s1] sm:$0xff]
    %v61 = vld [vmem:[%s1 + $0x8] sm:$0xff]
    %v62 = vld [vmem:[%s1 + $0x10] sm:$0xff]
    %v63 = vld [vmem:[%s1 + $0x18] sm:$0xff]
    %v64 = vld [vmem:[%s1 + $0x20] sm:$0xff]
    %v65 = vld [vmem:[%s1 + $0x28] sm:$0xff]
    %v66 = vld [vmem:[%s3] sm:$0xff]
    %v67 = vld [vmem:[%s5] sm:$0x1]
    %v69 = vperm.slane %v67, 0
    %vm71 = vcmask 64512
    %v73 = vsel %vm71, %v60, 0
    %v76 = vsel %vm71, %v61, 0
    %v79 = vsel %vm71, %v62, 0
    %v82 = vsel %vm71, %v63, 0
    %v85 = vsel %vm71, %v64, 0
    %v88 = vsel %vm71, %v65, 0
    %90 = vmatpush.msra.mxu0 0.0
    %91 = vmatpush.msra.mxu0 0.0
    %92 = vmatpush.msra.mxu0 0.0
    %93 = vmatpush.msra.mxu0 0.0
    %94 = vmatpush.msra.mxu0 0.0
    %95 = vmatpush.msra.mxu0 0.0
    %96 = vmatpush.msra.mxu0 0.0
    %97 = vmatpush.msra.mxu0 0.0
    %98 = vmatpush.msra.mxu0 0.0
    %99 = vmatpush.msra.mxu0 0.0
    %100 = vmatpush.msra.mxu0 0.0
    %101 = vmatpush.msra.mxu0 0.0
    %102 = vmatpush.msra.mxu0 0.0
    %103 = vmatpush.msra.mxu0 0.0
    %104 = vmatpush.msra.mxu0 0.0
    %105 = vmatpush.msra.mxu0 %v66
    %106 = vmatmul.f32.gmra.mxu0 %v73
    %v107 = vpop.f32.mrf.mxu0
    %v108 = vadd.f32 %v69, %v107
    %109 = vmatmul.f32.gmra.mxu0 %v76
    %v110 = vpop.f32.mrf.mxu0
    %v111 = vadd.f32 %v69, %v110
    %112 = vmatmul.f32.gmra.mxu0 %v79
    %v113 = vpop.f32.mrf.mxu0
    %v114 = vadd.f32 %v69, %v113
    %115 = vmatmul.f32.gmra.mxu0 %v82
    %v116 = vpop.f32.mrf.mxu0
    %v117 = vadd.f32 %v69, %v116
    %118 = vmatmul.f32.gmra.mxu0 %v85
    %v119 = vpop.f32.mrf.mxu0
    %v120 = vadd.f32 %v69, %v119
    %121 = vmatmul.f32.gmra.mxu0 %v88
    %v122 = vpop.f32.mrf.mxu0
    %v123 = vadd.f32 %v69, %v122
    %124 = vdwg.mxu0
    %s125 = scalar_lea.vmem %s1, 40
    %v126 = vld [vmem:[%s125] sm:$0xff]
    %v127 = vld [vmem:[%s6] sm:$0xff]
    %v128 = vld [vmem:[%s7] sm:$0x1]
    %v130 = vperm.slane %v128, 0
    %v133 = vsel %vm71, %v126, 0
    %135 = vmatpush.msra.mxu0 0.0
    %136 = vmatpush.msra.mxu0 0.0
    %137 = vmatpush.msra.mxu0 0.0
    %138 = vmatpush.msra.mxu0 0.0
    %139 = vmatpush.msra.mxu0 0.0
    %140 = vmatpush.msra.mxu0 0.0
    %141 = vmatpush.msra.mxu0 0.0
    %142 = vmatpush.msra.mxu0 0.0
    %143 = vmatpush.msra.mxu0 0.0
    %144 = vmatpush.msra.mxu0 0.0
    %145 = vmatpush.msra.mxu0 0.0
    %146 = vmatpush.msra.mxu0 0.0
    %147 = vmatpush.msra.mxu0 0.0
    %148 = vmatpush.msra.mxu0 0.0
    %149 = vmatpush.msra.mxu0 0.0
    %150 = vmatpush.msra.mxu0 %v127
    %151 = vmatmul.f32.gmra.mxu0 %v133
    %v152 = vpop.f32.mrf.mxu0
    %v153 = vadd.f32 %v130, %v152
    %154 = vdwg.mxu0
    %v155 = vld [vmem:[%s2] sm:$0xff]
    %v156 = vld [vmem:[%s2 + $0x8] sm:$0xff]
    %v157 = vld [vmem:[%s2 + $0x10] sm:$0xff]
    %v158 = vld [vmem:[%s2 + $0x18] sm:$0xff]
    %v159 = vld [vmem:[%s8] sm:$0xff]
    %v161 = vsel %vm71, %v155, 0
    %v164 = vsel %vm71, %v156, 0
    %v167 = vsel %vm71, %v157, 0
    %v170 = vsel %vm71, %v158, 0
    %172 = vmatpush.msra.mxu0 0.0
    %173 = vmatpush.msra.mxu0 0.0
    %174 = vmatpush.msra.mxu0 0.0
    %175 = vmatpush.msra.mxu0 0.0
    %176 = vmatpush.msra.mxu0 0.0
    %177 = vmatpush.msra.mxu0 0.0
    %178 = vmatpush.msra.mxu0 0.0
    %179 = vmatpush.msra.mxu0 0.0
    %180 = vmatpush.msra.mxu0 0.0
    %181 = vmatpush.msra.mxu0 0.0
    %182 = vmatpush.msra.mxu0 0.0
    %183 = vmatpush.msra.mxu0 0.0
    %184 = vmatpush.msra.mxu0 0.0
    %185 = vmatpush.msra.mxu0 0.0
    %186 = vmatpush.msra.mxu0 0.0
    %187 = vmatpush.msra.mxu0 %v159
    %188 = vmatmul.f32.gmra.mxu0 %v161
    %v189 = vpop.f32.mrf.mxu0
    %v190 = vadd.f32 0.0, %v189
    %191 = vmatmul.f32.gmra.mxu0 %v164
    %v192 = vpop.f32.mrf.mxu0
    %v193 = vadd.f32 0.0, %v192
    %194 = vmatmul.f32.gmra.mxu0 %v167
    %v195 = vpop.f32.mrf.mxu0
    %v196 = vadd.f32 0.0, %v195
    %197 = vmatmul.f32.gmra.mxu0 %v170
    %v198 = vpop.f32.mrf.mxu0
    %v199 = vadd.f32 0.0, %v198
    %200 = vdwg.mxu0
    %v201 = vld [vmem:[%s4] sm:$0xff]
    %v202 = vld [vmem:[%s4 + $0x8] sm:$0xff]
    %vm203 = vcmask 130048
    %v205 = vsel %vm203, 0.0, 0
    %207 = vmatpush.msra.mxu0 0.0
    %208 = vmatpush.msra.mxu0 0.0
    %209 = vmatpush.msra.mxu0 0.0
    %210 = vmatpush.msra.mxu0 0.0
    %211 = vmatpush.msra.mxu0 0.0
    %212 = vmatpush.msra.mxu0 0.0
    %213 = vmatpush.msra.mxu0 0.0
    %214 = vmatpush.msra.mxu0 0.0
    %215 = vmatpush.msra.mxu0 0.0
    %216 = vmatpush.msra.mxu0 0.0
    %217 = vmatpush.msra.mxu0 0.0
    %218 = vmatpush.msra.mxu0 0.0
    %219 = vmatpush.msra.mxu0 0.0
    %220 = vmatpush.msra.mxu0 0.0
    %221 = vmatpush.msra.mxu0 %v202
    %222 = vmatpush.msra.mxu0 %v201
    %223 = vmatmul.f32.gmra.mxu0 %v205
    %v224 = vpop.f32.mrf.mxu0
    %v225 = vadd.f32 0.0, %v224
    %226 = vdwg.mxu0
    %v227 = vadd.f32 %v108, %v225
    %v228 = vxor.u32 %v227, 2147483648
    %v229 = vmul.f32 %v228, 1.442695
    %v230 = vpow.pop %v229
    %v231 = vadd.f32 %v230, 1.0
    %v232 = vrcp.pop %v231
    %v233 = vmul.f32 %v231, %v232
    %v234 = vsub.f32 1.0, %v233
    %v235 = vmul.f32 %v232, %v234
    %v236 = vadd.f32 %v232, %v235
    %vm237 = vweird.f32 %v231
    %vm238 = vweird.f32 %v232
    %vm239 = vmor %vm237, %vm238
    %v240 = vsel %vm239, %v232, %v236
    %v241 = vand.u32 2147483647, %v231
    %vm242 = vcmp.eq.f32.partialorder %v241, 8.507059e+37
    %v243 = vand.u32 %v231, 2147483648
    %v244 = vor.u32 1.1754944e-38, %v243
    %v245 = vsel %vm242, %v244, %v240
    %v246 = vmul.f32 1.0, %v245
    %v247 = vtanh.pop %v227
    %v248 = vmul.f32 %v246, 0.0
    %250 = vrot.lane.b32.xlu0 %v247, 96
    %v251 = vpop.permute.xlu0 %250
    %v253 = vmul.f32 %v246, %v251
    %255 = vrot.lane.b32.xlu0 %v253, 16
    %v256 = vpop.permute.xlu0 %255
    %v258 = vadd.f32 %v248, %v256
    %v259 = vtanh.pop %v258
    %261 = vrot.lane.b32.xlu0 %v259, 32
    %v262 = vpop.permute.xlu0 %261
    %v264 = vmul.f32 %v246, %v262
    %266 = vrot.lane.b32.xlu0 %v264, 80
    %v267 = vpop.permute.xlu0 %266
    %v268 = vsel %vm203, %v267, 0
    %270 = vmatpush.msra.mxu0 0.0
    %271 = vmatpush.msra.mxu0 0.0
    %272 = vmatpush.msra.mxu0 0.0
    %273 = vmatpush.msra.mxu0 0.0
    %274 = vmatpush.msra.mxu0 0.0
    %275 = vmatpush.msra.mxu0 0.0
    %276 = vmatpush.msra.mxu0 0.0
    %277 = vmatpush.msra.mxu0 0.0
    %278 = vmatpush.msra.mxu0 0.0
    %279 = vmatpush.msra.mxu0 0.0
    %280 = vmatpush.msra.mxu0 0.0
    %281 = vmatpush.msra.mxu0 0.0
    %282 = vmatpush.msra.mxu0 0.0
    %283 = vmatpush.msra.mxu0 0.0
    %284 = vmatpush.msra.mxu0 %v202
    %285 = vmatpush.msra.mxu0 %v201
    %286 = vmatmul.f32.gmra.mxu0 %v268
    %v287 = vpop.f32.mrf.mxu0
    %v288 = vadd.f32 0.0, %v287
    %289 = vdwg.mxu0
    %v290 = vadd.f32 %v111, %v288
    %v291 = vxor.u32 %v290, 2147483648
    %v292 = vmul.f32 %v291, 1.442695
    %v293 = vpow.pop %v292
    %v294 = vadd.f32 %v293, 1.0
    %v295 = vrcp.pop %v294
    %v296 = vmul.f32 %v294, %v295
    %v297 = vsub.f32 1.0, %v296
    %v298 = vmul.f32 %v295, %v297
    %v299 = vadd.f32 %v295, %v298
    %vm300 = vweird.f32 %v294
    %vm301 = vweird.f32 %v295
    %vm302 = vmor %vm300, %vm301
    %v303 = vsel %vm302, %v295, %v299
    %v304 = vand.u32 2147483647, %v294
    %vm305 = vcmp.eq.f32.partialorder %v304, 8.507059e+37
    %v306 = vand.u32 %v294, 2147483648
    %v307 = vor.u32 1.1754944e-38, %v306
    %v308 = vsel %vm305, %v307, %v303
    %v309 = vmul.f32 1.0, %v308
    %v310 = vtanh.pop %v290
    %v311 = vmul.f32 %v309, %v258
    %313 = vrot.lane.b32.xlu0 %v310, 96
    %v314 = vpop.permute.xlu0 %313
    %v316 = vmul.f32 %v309, %v314
    %318 = vrot.lane.b32.xlu0 %v316, 16
    %v319 = vpop.permute.xlu0 %318
    %v321 = vadd.f32 %v311, %v319
    %v322 = vtanh.pop %v321
    %324 = vrot.lane.b32.xlu0 %v322, 32
    %v325 = vpop.permute.xlu0 %324
    %v327 = vmul.f32 %v309, %v325
    %329 = vrot.lane.b32.xlu0 %v327, 80
    %v330 = vpop.permute.xlu0 %329
    %v331 = vsel %vm203, %v330, 0
    %333 = vmatpush.msra.mxu0 0.0
    %334 = vmatpush.msra.mxu0 0.0
    %335 = vmatpush.msra.mxu0 0.0
    %336 = vmatpush.msra.mxu0 0.0
    %337 = vmatpush.msra.mxu0 0.0
    %338 = vmatpush.msra.mxu0 0.0
    %339 = vmatpush.msra.mxu0 0.0
    %340 = vmatpush.msra.mxu0 0.0
    %341 = vmatpush.msra.mxu0 0.0
    %342 = vmatpush.msra.mxu0 0.0
    %343 = vmatpush.msra.mxu0 0.0
    %344 = vmatpush.msra.mxu0 0.0
    %345 = vmatpush.msra.mxu0 0.0
    %346 = vmatpush.msra.mxu0 0.0
    %347 = vmatpush.msra.mxu0 %v202
    %348 = vmatpush.msra.mxu0 %v201
    %349 = vmatmul.f32.gmra.mxu0 %v331
    %v350 = vpop.f32.mrf.mxu0
    %v351 = vadd.f32 0.0, %v350
    %352 = vdwg.mxu0
    %v353 = vadd.f32 %v114, %v351
    %v354 = vxor.u32 %v353, 2147483648
    %v355 = vmul.f32 %v354, 1.442695
    %v356 = vpow.pop %v355
    %v357 = vadd.f32 %v356, 1.0
    %v358 = vrcp.pop %v357
    %v359 = vmul.f32 %v357, %v358
    %v360 = vsub.f32 1.0, %v359
    %v361 = vmul.f32 %v358, %v360
    %v362 = vadd.f32 %v358, %v361
    %vm363 = vweird.f32 %v357
    %vm364 = vweird.f32 %v358
    %vm365 = vmor %vm363, %vm364
    %v366 = vsel %vm365, %v358, %v362
    %v367 = vand.u32 2147483647, %v357
    %vm368 = vcmp.eq.f32.partialorder %v367, 8.507059e+37
    %v369 = vand.u32 %v357, 2147483648
    %v370 = vor.u32 1.1754944e-38, %v369
    %v371 = vsel %vm368, %v370, %v366
    %v372 = vmul.f32 1.0, %v371
    %v373 = vtanh.pop %v353
    %v374 = vmul.f32 %v372, %v321
    %376 = vrot.lane.b32.xlu0 %v373, 96
    %v377 = vpop.permute.xlu0 %376
    %v379 = vmul.f32 %v372, %v377
    %381 = vrot.lane.b32.xlu0 %v379, 16
    %v382 = vpop.permute.xlu0 %381
    %v384 = vadd.f32 %v374, %v382
    %v385 = vtanh.pop %v384
    %387 = vrot.lane.b32.xlu0 %v385, 32
    %v388 = vpop.permute.xlu0 %387
    %v390 = vmul.f32 %v372, %v388
    %392 = vrot.lane.b32.xlu0 %v390, 80
    %v393 = vpop.permute.xlu0 %392
    %v394 = vsel %vm203, %v393, 0
    %396 = vmatpush.msra.mxu0 0.0
    %397 = vmatpush.msra.mxu0 0.0
    %398 = vmatpush.msra.mxu0 0.0
    %399 = vmatpush.msra.mxu0 0.0
    %400 = vmatpush.msra.mxu0 0.0
    %401 = vmatpush.msra.mxu0 0.0
    %402 = vmatpush.msra.mxu0 0.0
    %403 = vmatpush.msra.mxu0 0.0
    %404 = vmatpush.msra.mxu0 0.0
    %405 = vmatpush.msra.mxu0 0.0
    %406 = vmatpush.msra.mxu0 0.0
    %407 = vmatpush.msra.mxu0 0.0
    %408 = vmatpush.msra.mxu0 0.0
    %409 = vmatpush.msra.mxu0 0.0
    %410 = vmatpush.msra.mxu0 %v202
    %411 = vmatpush.msra.mxu0 %v201
    %412 = vmatmul.f32.gmra.mxu0 %v394
    %v413 = vpop.f32.mrf.mxu0
    %v414 = vadd.f32 0.0, %v413
    %415 = vdwg.mxu0
    %v416 = vadd.f32 %v117, %v414
    %v417 = vxor.u32 %v416, 2147483648
    %v418 = vmul.f32 %v417, 1.442695
    %v419 = vpow.pop %v418
    %v420 = vadd.f32 %v419, 1.0
    %v421 = vrcp.pop %v420
    %v422 = vmul.f32 %v420, %v421
    %v423 = vsub.f32 1.0, %v422
    %v424 = vmul.f32 %v421, %v423
    %v425 = vadd.f32 %v421, %v424
    %vm426 = vweird.f32 %v420
    %vm427 = vweird.f32 %v421
    %vm428 = vmor %vm426, %vm427
    %v429 = vsel %vm428, %v421, %v425
    %v430 = vand.u32 2147483647, %v420
    %vm431 = vcmp.eq.f32.partialorder %v430, 8.507059e+37
    %v432 = vand.u32 %v420, 2147483648
    %v433 = vor.u32 1.1754944e-38, %v432
    %v434 = vsel %vm431, %v433, %v429
    %v435 = vmul.f32 1.0, %v434
    %v436 = vtanh.pop %v416
    %v437 = vmul.f32 %v435, %v384
    %439 = vrot.lane.b32.xlu0 %v436, 96
    %v440 = vpop.permute.xlu0 %439
    %v442 = vmul.f32 %v435, %v440
    %444 = vrot.lane.b32.xlu0 %v442, 16
    %v445 = vpop.permute.xlu0 %444
    %v447 = vadd.f32 %v437, %v445
    %v448 = vtanh.pop %v447
    %450 = vrot.lane.b32.xlu0 %v448, 32
    %v451 = vpop.permute.xlu0 %450
    %v453 = vmul.f32 %v435, %v451
    %455 = vrot.lane.b32.xlu0 %v453, 80
    %v456 = vpop.permute.xlu0 %455
    %v457 = vsel %vm203, %v456, 0
    %459 = vmatpush.msra.mxu0 0.0
    %460 = vmatpush.msra.mxu0 0.0
    %461 = vmatpush.msra.mxu0 0.0
    %462 = vmatpush.msra.mxu0 0.0
    %463 = vmatpush.msra.mxu0 0.0
    %464 = vmatpush.msra.mxu0 0.0
    %465 = vmatpush.msra.mxu0 0.0
    %466 = vmatpush.msra.mxu0 0.0
    %467 = vmatpush.msra.mxu0 0.0
    %468 = vmatpush.msra.mxu0 0.0
    %469 = vmatpush.msra.mxu0 0.0
    %470 = vmatpush.msra.mxu0 0.0
    %471 = vmatpush.msra.mxu0 0.0
    %472 = vmatpush.msra.mxu0 0.0
    %473 = vmatpush.msra.mxu0 %v202
    %474 = vmatpush.msra.mxu0 %v201
    %475 = vmatmul.f32.gmra.mxu0 %v457
    %v476 = vpop.f32.mrf.mxu0
    %v477 = vadd.f32 0.0, %v476
    %478 = vdwg.mxu0
    %v479 = vadd.f32 %v120, %v477
    %v480 = vxor.u32 %v479, 2147483648
    %v481 = vmul.f32 %v480, 1.442695
    %v482 = vpow.pop %v481
    %v483 = vadd.f32 %v482, 1.0
    %v484 = vrcp.pop %v483
    %v485 = vmul.f32 %v483, %v484
    %v486 = vsub.f32 1.0, %v485
    %v487 = vmul.f32 %v484, %v486
    %v488 = vadd.f32 %v484, %v487
    %vm489 = vweird.f32 %v483
    %vm490 = vweird.f32 %v484
    %vm491 = vmor %vm489, %vm490
    %v492 = vsel %vm491, %v484, %v488
    %v493 = vand.u32 2147483647, %v483
    %vm494 = vcmp.eq.f32.partialorder %v493, 8.507059e+37
    %v495 = vand.u32 %v483, 2147483648
    %v496 = vor.u32 1.1754944e-38, %v495
    %v497 = vsel %vm494, %v496, %v492
    %v498 = vmul.f32 1.0, %v497
    %v499 = vtanh.pop %v479
    %v500 = vmul.f32 %v498, %v447
    %502 = vrot.lane.b32.xlu0 %v499, 96
    %v503 = vpop.permute.xlu0 %502
    %v505 = vmul.f32 %v498, %v503
    %507 = vrot.lane.b32.xlu0 %v505, 16
    %v508 = vpop.permute.xlu0 %507
    %v510 = vadd.f32 %v500, %v508
    %v511 = vtanh.pop %v510
    %513 = vrot.lane.b32.xlu0 %v511, 32
    %v514 = vpop.permute.xlu0 %513
    %v516 = vmul.f32 %v498, %v514
    %518 = vrot.lane.b32.xlu0 %v516, 80
    %v519 = vpop.permute.xlu0 %518
    %v520 = vsel %vm203, %v519, 0
    %522 = vmatpush.msra.mxu0 0.0
    %523 = vmatpush.msra.mxu0 0.0
    %524 = vmatpush.msra.mxu0 0.0
    %525 = vmatpush.msra.mxu0 0.0
    %526 = vmatpush.msra.mxu0 0.0
    %527 = vmatpush.msra.mxu0 0.0
    %528 = vmatpush.msra.mxu0 0.0
    %529 = vmatpush.msra.mxu0 0.0
    %530 = vmatpush.msra.mxu0 0.0
    %531 = vmatpush.msra.mxu0 0.0
    %532 = vmatpush.msra.mxu0 0.0
    %533 = vmatpush.msra.mxu0 0.0
    %534 = vmatpush.msra.mxu0 0.0
    %535 = vmatpush.msra.mxu0 0.0
    %536 = vmatpush.msra.mxu0 %v202
    %537 = vmatpush.msra.mxu0 %v201
    %538 = vmatmul.f32.gmra.mxu0 %v520
    %v539 = vpop.f32.mrf.mxu0
    %v540 = vadd.f32 0.0, %v539
    %541 = vdwg.mxu0
    %v542 = vadd.f32 %v123, %v540
    %v543 = vxor.u32 %v542, 2147483648
    %v544 = vmul.f32 %v543, 1.442695
    %v545 = vpow.pop %v544
    %v546 = vadd.f32 %v545, 1.0
    %v547 = vrcp.pop %v546
    %v548 = vmul.f32 %v546, %v547
    %v549 = vsub.f32 1.0, %v548
    %v550 = vmul.f32 %v547, %v549
    %v551 = vadd.f32 %v547, %v550
    %vm552 = vweird.f32 %v546
    %vm553 = vweird.f32 %v547
    %vm554 = vmor %vm552, %vm553
    %v555 = vsel %vm554, %v547, %v551
    %v556 = vand.u32 2147483647, %v546
    %vm557 = vcmp.eq.f32.partialorder %v556, 8.507059e+37
    %v558 = vand.u32 %v546, 2147483648
    %v559 = vor.u32 1.1754944e-38, %v558
    %v560 = vsel %vm557, %v559, %v555
    %v561 = vmul.f32 1.0, %v560
    %v562 = vtanh.pop %v542
    %v563 = vmul.f32 %v561, %v510
    %565 = vrot.lane.b32.xlu0 %v562, 96
    %v566 = vpop.permute.xlu0 %565
    %v568 = vmul.f32 %v561, %v566
    %570 = vrot.lane.b32.xlu0 %v568, 16
    %v571 = vpop.permute.xlu0 %570
    %v573 = vadd.f32 %v563, %v571
    %v574 = vtanh.pop %v573
    %576 = vrot.lane.b32.xlu0 %v574, 32
    %v577 = vpop.permute.xlu0 %576
    %v579 = vmul.f32 %v561, %v577
    %v580 = vld [vmem:[%s9] sm:$0xff]
    %v581 = vld [vmem:[%s9 + $0x8] sm:$0xff]
    %v582 = vld [vmem:[%s10] sm:$0x1]
    %v584 = vperm.slane %v582, 0
    %v586 = vld [vmem:[%s11] sm:$0x1]
    %v588 = vperm.slane %v586, 0
    %590 = vrot.lane.b32.xlu0 %v579, 80
    %v591 = vpop.permute.xlu0 %590
    %v592 = vsel %vm203, %v591, 0
    %594 = vmatpush.msra.mxu0 0.0
    %595 = vmatpush.msra.mxu0 0.0
    %596 = vmatpush.msra.mxu0 0.0
    %597 = vmatpush.msra.mxu0 0.0
    %598 = vmatpush.msra.mxu0 0.0
    %599 = vmatpush.msra.mxu0 0.0
    %600 = vmatpush.msra.mxu0 0.0
    %601 = vmatpush.msra.mxu0 0.0
    %602 = vmatpush.msra.mxu0 0.0
    %603 = vmatpush.msra.mxu0 0.0
    %604 = vmatpush.msra.mxu0 0.0
    %605 = vmatpush.msra.mxu0 0.0
    %606 = vmatpush.msra.mxu0 0.0
    %607 = vmatpush.msra.mxu0 0.0
    %608 = vmatpush.msra.mxu0 %v581
    %609 = vmatpush.msra.mxu0 %v580
    %610 = vmatmul.f32.gmra.mxu0 %v592
    %v611 = vpop.f32.mrf.mxu0
    %v612 = vadd.f32 0.0, %v611
    %613 = vdwg.mxu0
    %v614 = vadd.f32 %v153, %v612
    %v615 = vadd.f32 %v614, %v584
    %v616 = vxor.u32 %v615, 2147483648
    %v617 = vmul.f32 %v616, 1.442695
    %v618 = vpow.pop %v617
    %v619 = vadd.f32 %v618, 1.0
    %v620 = vrcp.pop %v619
    %v621 = vmul.f32 %v619, %v620
    %v622 = vsub.f32 1.0, %v621
    %v623 = vmul.f32 %v620, %v622
    %v624 = vadd.f32 %v620, %v623
    %vm625 = vweird.f32 %v619
    %vm626 = vweird.f32 %v620
    %vm627 = vmor %vm625, %vm626
    %v628 = vsel %vm627, %v620, %v624
    %v629 = vand.u32 2147483647, %v619
    %vm630 = vcmp.eq.f32.partialorder %v629, 8.507059e+37
    %v631 = vand.u32 %v619, 2147483648
    %v632 = vor.u32 1.1754944e-38, %v631
    %v633 = vsel %vm630, %v632, %v628
    %v634 = vmul.f32 1.0, %v633
    %v635 = vtanh.pop %v615
    %v636 = vmul.f32 %v634, %v573
    %638 = vrot.lane.b32.xlu0 %v635, 96
    %v639 = vpop.permute.xlu0 %638
    %v641 = vmul.f32 %v634, %v639
    %643 = vrot.lane.b32.xlu0 %v641, 16
    %v644 = vpop.permute.xlu0 %643
    %v646 = vadd.f32 %v636, %v644
    %v647 = vtanh.pop %v646
    %649 = vrot.lane.b32.xlu0 %v647, 32
    %v650 = vpop.permute.xlu0 %649
    %v652 = vmul.f32 %v634, %v650
    %654 = vrot.lane.b32.xlu0 %v652, 80
    %v655 = vpop.permute.xlu0 %654
    %v656 = vsel %vm203, %v655, 0
    %658 = vmatpush.msra.mxu0 0.0
    %659 = vmatpush.msra.mxu0 0.0
    %660 = vmatpush.msra.mxu0 0.0
    %661 = vmatpush.msra.mxu0 0.0
    %662 = vmatpush.msra.mxu0 0.0
    %663 = vmatpush.msra.mxu0 0.0
    %664 = vmatpush.msra.mxu0 0.0
    %665 = vmatpush.msra.mxu0 0.0
    %666 = vmatpush.msra.mxu0 0.0
    %667 = vmatpush.msra.mxu0 0.0
    %668 = vmatpush.msra.mxu0 0.0
    %669 = vmatpush.msra.mxu0 0.0
    %670 = vmatpush.msra.mxu0 0.0
    %671 = vmatpush.msra.mxu0 0.0
    %672 = vmatpush.msra.mxu0 %v581
    %673 = vmatpush.msra.mxu0 %v580
    %674 = vmatmul.f32.gmra.mxu0 %v656
    %v675 = vpop.f32.mrf.mxu0
    %v676 = vadd.f32 0.0, %v675
    %677 = vdwg.mxu0
    %s678 = sld [smem:[#allocation2]]
    %s679 = scvt.s32.f32 %s678
    %v680 = vstv %s679
    %v681 = vmul.f32 %v680, %v190
    %s682 = ssub.f32 1.0, %s679
    %683 = vrot.lane.b32.xlu0 %v588, 64
    %v684 = vpop.permute.xlu0 %683
    %v686 = vadd.f32 %v676, %v684
    %v687 = vstv %s682
    %v688 = vmul.f32 %v687, %v686
    %690 = vrot.lane.b32.xlu0 %v688, 64
    %v691 = vpop.permute.xlu0 %690
    %v693 = vadd.f32 %v681, %v691
    %v694 = vadd.f32 %v693, %v676
    %v695 = vadd.f32 %v694, %v584
    %v696 = vxor.u32 %v695, 2147483648
    %v697 = vmul.f32 %v696, 1.442695
    %v698 = vpow.pop %v697
    %v699 = vadd.f32 %v698, 1.0
    %v700 = vrcp.pop %v699
    %v701 = vmul.f32 %v699, %v700
    %v702 = vsub.f32 1.0, %v701
    %v703 = vmul.f32 %v700, %v702
    %v704 = vadd.f32 %v700, %v703
    %vm705 = vweird.f32 %v699
    %vm706 = vweird.f32 %v700
    %vm707 = vmor %vm705, %vm706
    %v708 = vsel %vm707, %v700, %v704
    %v709 = vand.u32 2147483647, %v699
    %vm710 = vcmp.eq.f32.partialorder %v709, 8.507059e+37
    %v711 = vand.u32 %v699, 2147483648
    %v712 = vor.u32 1.1754944e-38, %v711
    %v713 = vsel %vm710, %v712, %v708
    %v714 = vmul.f32 1.0, %v713
    %v715 = vtanh.pop %v695
    %v716 = vmul.f32 %v714, %v646
    %718 = vrot.lane.b32.xlu0 %v715, 96
    %v719 = vpop.permute.xlu0 %718
    %v721 = vmul.f32 %v714, %v719
    %723 = vrot.lane.b32.xlu0 %v721, 16
    %v724 = vpop.permute.xlu0 %723
    %v726 = vadd.f32 %v716, %v724
    %v727 = vtanh.pop %v726
    %729 = vrot.lane.b32.xlu0 %v727, 32
    %v730 = vpop.permute.xlu0 %729
    %v732 = vmul.f32 %v714, %v730
    %734 = vrot.lane.b32.xlu0 %v732, 80
    %v735 = vpop.permute.xlu0 %734
    %v736 = vsel %vm203, %v735, 0
    %738 = vmatpush.msra.mxu0 0.0
    %739 = vmatpush.msra.mxu0 0.0
    %740 = vmatpush.msra.mxu0 0.0
    %741 = vmatpush.msra.mxu0 0.0
    %742 = vmatpush.msra.mxu0 0.0
    %743 = vmatpush.msra.mxu0 0.0
    %744 = vmatpush.msra.mxu0 0.0
    %745 = vmatpush.msra.mxu0 0.0
    %746 = vmatpush.msra.mxu0 0.0
    %747 = vmatpush.msra.mxu0 0.0
    %748 = vmatpush.msra.mxu0 0.0
    %749 = vmatpush.msra.mxu0 0.0
    %750 = vmatpush.msra.mxu0 0.0
    %751 = vmatpush.msra.mxu0 0.0
    %752 = vmatpush.msra.mxu0 %v581
    %753 = vmatpush.msra.mxu0 %v580
    %754 = vmatmul.f32.gmra.mxu0 %v736
    %v755 = vpop.f32.mrf.mxu0
    %v756 = vadd.f32 0.0, %v755
    %757 = vdwg.mxu0
    %s758 = sld [smem:[#allocation2 + $0x1]]
    %s759 = scvt.s32.f32 %s758
    %v760 = vstv %s759
    %v761 = vmul.f32 %v760, %v193
    %s762 = ssub.f32 1.0, %s759
    %v763 = vadd.f32 %v756, %v684
    %v764 = vstv %s762
    %v765 = vmul.f32 %v764, %v763
    %767 = vrot.lane.b32.xlu0 %v765, 64
    %v768 = vpop.permute.xlu0 %767
    %v770 = vadd.f32 %v761, %v768
    %v771 = vadd.f32 %v770, %v756
    %v772 = vadd.f32 %v771, %v584
    %v773 = vxor.u32 %v772, 2147483648
    %v774 = vmul.f32 %v773, 1.442695
    %v775 = vpow.pop %v774
    %v776 = vadd.f32 %v775, 1.0
    %v777 = vrcp.pop %v776
    %v778 = vmul.f32 %v776, %v777
    %v779 = vsub.f32 1.0, %v778
    %v780 = vmul.f32 %v777, %v779
    %v781 = vadd.f32 %v777, %v780
    %vm782 = vweird.f32 %v776
    %vm783 = vweird.f32 %v777
    %vm784 = vmor %vm782, %vm783
    %v785 = vsel %vm784, %v777, %v781
    %v786 = vand.u32 2147483647, %v776
    %vm787 = vcmp.eq.f32.partialorder %v786, 8.507059e+37
    %v788 = vand.u32 %v776, 2147483648
    %v789 = vor.u32 1.1754944e-38, %v788
    %v790 = vsel %vm787, %v789, %v785
    %v791 = vmul.f32 1.0, %v790
    %v792 = vtanh.pop %v772
    %v793 = vmul.f32 %v791, %v726
    %795 = vrot.lane.b32.xlu0 %v792, 96
    %v796 = vpop.permute.xlu0 %795
    %v798 = vmul.f32 %v791, %v796
    %800 = vrot.lane.b32.xlu0 %v798, 16
    %v801 = vpop.permute.xlu0 %800
    %v803 = vadd.f32 %v793, %v801
    %v804 = vtanh.pop %v803
    %806 = vrot.lane.b32.xlu0 %v804, 32
    %v807 = vpop.permute.xlu0 %806
    %v809 = vmul.f32 %v791, %v807
    %811 = vrot.lane.b32.xlu0 %v809, 80
    %v812 = vpop.permute.xlu0 %811
    %v813 = vsel %vm203, %v812, 0
    %815 = vmatpush.msra.mxu0 0.0
    %816 = vmatpush.msra.mxu0 0.0
    %817 = vmatpush.msra.mxu0 0.0
    %818 = vmatpush.msra.mxu0 0.0
    %819 = vmatpush.msra.mxu0 0.0
    %820 = vmatpush.msra.mxu0 0.0
    %821 = vmatpush.msra.mxu0 0.0
    %822 = vmatpush.msra.mxu0 0.0
    %823 = vmatpush.msra.mxu0 0.0
    %824 = vmatpush.msra.mxu0 0.0
    %825 = vmatpush.msra.mxu0 0.0
    %826 = vmatpush.msra.mxu0 0.0
    %827 = vmatpush.msra.mxu0 0.0
    %828 = vmatpush.msra.mxu0 0.0
    %829 = vmatpush.msra.mxu0 %v581
    %830 = vmatpush.msra.mxu0 %v580
    %831 = vmatmul.f32.gmra.mxu0 %v813
    %v832 = vpop.f32.mrf.mxu0
    %v833 = vadd.f32 0.0, %v832
    %834 = vdwg.mxu0
    %s835 = sld [smem:[#allocation2 + $0x2]]
    %s836 = scvt.s32.f32 %s835
    %v837 = vstv %s836
    %v838 = vmul.f32 %v837, %v196
    %s839 = ssub.f32 1.0, %s836
    %v840 = vadd.f32 %v833, %v684
    %v841 = vstv %s839
    %v842 = vmul.f32 %v841, %v840
    %844 = vrot.lane.b32.xlu0 %v842, 64
    %v845 = vpop.permute.xlu0 %844
    %v847 = vadd.f32 %v838, %v845
    %v848 = vadd.f32 %v847, %v833
    %v849 = vadd.f32 %v848, %v584
    %v850 = vxor.u32 %v849, 2147483648
    %v851 = vmul.f32 %v850, 1.442695
    %v852 = vpow.pop %v851
    %v853 = vadd.f32 %v852, 1.0
    %v854 = vrcp.pop %v853
    %v855 = vmul.f32 %v853, %v854
    %v856 = vsub.f32 1.0, %v855
    %v857 = vmul.f32 %v854, %v856
    %v858 = vadd.f32 %v854, %v857
    %vm859 = vweird.f32 %v853
    %vm860 = vweird.f32 %v854
    %vm861 = vmor %vm859, %vm860
    %v862 = vsel %vm861, %v854, %v858
    %v863 = vand.u32 2147483647, %v853
    %vm864 = vcmp.eq.f32.partialorder %v863, 8.507059e+37
    %v865 = vand.u32 %v853, 2147483648
    %v866 = vor.u32 1.1754944e-38, %v865
    %v867 = vsel %vm864, %v866, %v862
    %v868 = vmul.f32 1.0, %v867
    %v869 = vtanh.pop %v849
    %v870 = vmul.f32 %v868, %v803
    %872 = vrot.lane.b32.xlu0 %v869, 96
    %v873 = vpop.permute.xlu0 %872
    %v875 = vmul.f32 %v868, %v873
    %877 = vrot.lane.b32.xlu0 %v875, 16
    %v878 = vpop.permute.xlu0 %877
    %v880 = vadd.f32 %v870, %v878
    %v881 = vtanh.pop %v880
    %883 = vrot.lane.b32.xlu0 %v881, 32
    %v884 = vpop.permute.xlu0 %883
    %v886 = vmul.f32 %v868, %v884
    %888 = vrot.lane.b32.xlu0 %v886, 80
    %v889 = vpop.permute.xlu0 %888
    %v890 = vsel %vm203, %v889, 0
    %892 = vmatpush.msra.mxu0 0.0
    %893 = vmatpush.msra.mxu0 0.0
    %894 = vmatpush.msra.mxu0 0.0
    %895 = vmatpush.msra.mxu0 0.0
    %896 = vmatpush.msra.mxu0 0.0
    %897 = vmatpush.msra.mxu0 0.0
    %898 = vmatpush.msra.mxu0 0.0
    %899 = vmatpush.msra.mxu0 0.0
    %900 = vmatpush.msra.mxu0 0.0
    %901 = vmatpush.msra.mxu0 0.0
    %902 = vmatpush.msra.mxu0 0.0
    %903 = vmatpush.msra.mxu0 0.0
    %904 = vmatpush.msra.mxu0 0.0
    %905 = vmatpush.msra.mxu0 0.0
    %906 = vmatpush.msra.mxu0 %v581
    %907 = vmatpush.msra.mxu0 %v580
    %908 = vmatmul.f32.gmra.mxu0 %v890
    %v909 = vpop.f32.mrf.mxu0
    %v910 = vadd.f32 0.0, %v909
    %911 = vdwg.mxu0
    %s912 = sld [smem:[#allocation2 + $0x3]]
    %s913 = scvt.s32.f32 %s912
    %v914 = vstv %s913
    %v915 = vmul.f32 %v914, %v199
    %s916 = ssub.f32 1.0, %s913
    %v917 = vadd.f32 %v910, %v684
    %v918 = vstv %s916
    %v919 = vmul.f32 %v918, %v917
    %921 = vrot.lane.b32.xlu0 %v919, 64
    %v922 = vpop.permute.xlu0 %921
    %v924 = vadd.f32 %v915, %v922
    %v925 = vadd.f32 %v924, %v910
    %v926 = vadd.f32 %v925, %v584
    %v927 = vxor.u32 %v926, 2147483648
    %v928 = vmul.f32 %v927, 1.442695
    %v929 = vpow.pop %v928
    %v930 = vadd.f32 %v929, 1.0
    %v931 = vrcp.pop %v930
    %v932 = vmul.f32 %v930, %v931
    %v933 = vsub.f32 1.0, %v932
    %v934 = vmul.f32 %v931, %v933
    %v935 = vadd.f32 %v931, %v934
    %vm936 = vweird.f32 %v930
    %vm937 = vweird.f32 %v931
    %vm938 = vmor %vm936, %vm937
    %v939 = vsel %vm938, %v931, %v935
    %v940 = vand.u32 2147483647, %v930
    %vm941 = vcmp.eq.f32.partialorder %v940, 8.507059e+37
    %v942 = vand.u32 %v930, 2147483648
    %v943 = vor.u32 1.1754944e-38, %v942
    %v944 = vsel %vm941, %v943, %v939
    %v945 = vmul.f32 1.0, %v944
    %v946 = vtanh.pop %v926
    %v947 = vmul.f32 %v945, %v880
    %949 = vrot.lane.b32.xlu0 %v946, 96
    %v950 = vpop.permute.xlu0 %949
    %v952 = vmul.f32 %v945, %v950
    %954 = vrot.lane.b32.xlu0 %v952, 16
    %v955 = vpop.permute.xlu0 %954
    %v957 = vadd.f32 %v947, %v955
    %v958 = vtanh.pop %v957
    %960 = vrot.lane.b32.xlu0 %v958, 32
    %v961 = vpop.permute.xlu0 %960
    %v963 = vmul.f32 %v945, %v961
    %v964 = vld [vmem:[%s12] sm:$0xff]
    %v965 = vld [vmem:[%s12 + $0x8] sm:$0xff]
    %v966 = vld [vmem:[%s13] sm:$0x1]
    %v968 = vperm.slane %v966, 0
    %971 = vrot.lane.b32.xlu0 %v963, 80
    %v972 = vpop.permute.xlu0 %971
    %v973 = vsel %vm203, %v972, 0
    %975 = vmatpush.msra.mxu0 0.0
    %976 = vmatpush.msra.mxu0 0.0
    %977 = vmatpush.msra.mxu0 0.0
    %978 = vmatpush.msra.mxu0 0.0
    %979 = vmatpush.msra.mxu0 0.0
    %980 = vmatpush.msra.mxu0 0.0
    %981 = vmatpush.msra.mxu0 0.0
    %982 = vmatpush.msra.mxu0 0.0
    %983 = vmatpush.msra.mxu0 0.0
    %984 = vmatpush.msra.mxu0 0.0
    %985 = vmatpush.msra.mxu0 0.0
    %986 = vmatpush.msra.mxu0 0.0
    %987 = vmatpush.msra.mxu0 0.0
    %988 = vmatpush.msra.mxu0 0.0
    %989 = vmatpush.msra.mxu0 %v965
    %990 = vmatpush.msra.mxu0 %v964
    %991 = vmatmul.f32.gmra.mxu0 %v656
    %v992 = vpop.f32.mrf.mxu0
    %v993 = vadd.f32 %v968, %v992
    %994 = vmatmul.f32.gmra.mxu0 %v736
    %v995 = vpop.f32.mrf.mxu0
    %v996 = vadd.f32 %v968, %v995
    %997 = vmatmul.f32.gmra.mxu0 %v813
    %v998 = vpop.f32.mrf.mxu0
    %v999 = vadd.f32 %v968, %v998
    %1000 = vmatmul.f32.gmra.mxu0 %v890
    %v1001 = vpop.f32.mrf.mxu0
    %v1002 = vadd.f32 %v968, %v1001
    %1003 = vmatmul.f32.gmra.mxu0 %v973
    %v1004 = vpop.f32.mrf.mxu0
    %v1005 = vadd.f32 %v968, %v1004
    %1006 = vdwg.mxu0
    %1007 = vst.msk [vmem:[%s14] sm:$0xff] %vm71, %v993
    %1008 = vst.msk [vmem:[%s14 + $0x8] sm:$0xff] %vm71, %v996
    %1009 = vst.msk [vmem:[%s14 + $0x10] sm:$0xff] %vm71, %v999
    %1010 = vst.msk [vmem:[%s14 + $0x18] sm:$0xff] %vm71, %v1002
    %1011 = vst.msk [vmem:[%s14 + $0x20] sm:$0xff] %vm71, %v1005
    // Predicated region
    $region62: #{seq2seq_forward.1} parent=1 // pred_check
      _
    $region63: #{seq2seq_forward.1} parent=1 // pred_check_branch
      %1013 = sbr.rel (0) target = $region65
    $region64: #{seq2seq_forward.1} parent=1 // pred_region
      _
    $region65: #{seq2seq_forward.1} parent=1 // pred_fallthru
      _
    // Predicated region
    $region66: #{seq2seq_forward.1} parent=1 // pred_check
      _
    $region67: #{seq2seq_forward.1} parent=1 // pred_check_branch
      %1015 = sbr.rel (0) target = $region69
    $region68: #{seq2seq_forward.1} parent=1 // pred_region
      _
    $region69: #{seq2seq_forward.1} parent=1 // pred_fallthru
      _
    %1016 = vsyncpa [#allocation3], 1

</llo_original>
